<compile_context>
chip_gen: v7x
topology: tpu7x:2x2x1
jax: 0.10.0
libtpu: 0.0.40
codegen_flags: <defaults>
</compile_context>

<pallas_src>
import functools

import jax
import jax.numpy as jnp
from jax import lax
from jax.experimental import pallas as pl
from jax.experimental.pallas import tpu as pltpu

# ---------------- config (mirrors args) ----------------
WAY = 4            # args.way
SHOT = 2           # args.shot
QUERY = 3          # query images per class
H_DIM = 64         # ConvNet embedding dim (args.model_type == 'ConvNet')
GD_LR = 0.05       # args.gd_lr
INNER_ITERS = 3    # args.inner_iters
TEMPERATURE = 0.5  # args.temperature
IMG = 16           # 16x16 -> four 2x2 maxpools -> 1x1 spatial -> flatten == 64
FC1_OUT = min(H_DIM * 4, 1024)   # 256
FC2_OUT = H_DIM + 1              # 65
FC2_PAD = 128                    # lane-dense padded output width


# ======================= Pallas kernel =======================

def _classifier_init_kernel(sup_ref, w1_ref, b1_ref, w2_ref, b2_ref, out_ref,
                            *, inv_way_m1):
    """proto = mean_shot(support)
       cond  = ((ones-eye)/(way-1)) @ proto == (sum(proto) - proto) / (way-1)  (VPU)
       out   = fc2(relu(fc1(concat([proto, cond], 1))))  -- one K=128 MXU dot
       Weights are in PyTorch (out, in) layout; dots contract on dim 1 of both
       operands (no transposes anywhere). Output is padded to 128 lanes."""
    sup = sup_ref[...]                                       # (shot, way, h) f32
    proto = jnp.mean(sup, axis=0)                            # (way, h) f32
    cond = (jnp.sum(proto, axis=0, keepdims=True) - proto) * inv_way_m1
    cat = jnp.concatenate([proto, cond], axis=1)             # (way, 2h) f32
    cat = cat.astype(jnp.bfloat16)                           # bf16 operands, f32 acc
    h1 = lax.dot_general(cat, w1_ref[...],                   # (way, fc1_out)
                         (((1,), (1,)), ((), ())),
                         preferred_element_type=jnp.float32) + b1_ref[...]
    h1 = jnp.maximum(h1, 0.0).astype(jnp.bfloat16)           # relu
    out_ref[...] = lax.dot_general(h1, w2_ref[...],          # (way, 128) lane-dense
                                   (((1,), (1,)), ((), ())),
                                   preferred_element_type=jnp.float32) + b2_ref[...]


def classifier_init_pallas(sup3, w1_bf16, b1_2d, w2p_bf16, b2p_2d):
    way = sup3.shape[1]
    kern = functools.partial(_classifier_init_kernel,
                             inv_way_m1=float(1.0 / (way - 1)))
    return pl.pallas_call(
        kern,
        out_shape=jax.ShapeDtypeStruct((way, FC2_PAD), jnp.float32),
        in_specs=[pl.BlockSpec(memory_space=pltpu.MemorySpace.VMEM)] * 5,
        out_specs=pl.BlockSpec(memory_space=pltpu.MemorySpace.VMEM),
    )(sup3.astype(jnp.float32), w1_bf16, b1_2d, w2p_bf16, b2p_2d)


def prepare_generator_params(fc1_w, fc1_b, fc2_w, fc2_b):
    """One-time (outside jit) prep: bf16 weight cast + pad fc2 rows 65->128.
       No transposes: the kernel contracts on dim 1 of the (out, in) weights."""
    w1 = fc1_w.astype(jnp.bfloat16)                                  # (256, 128)
    b1 = fc1_b.reshape(1, -1).astype(jnp.float32)                    # (1, 256)
    w2p = jnp.zeros((FC2_PAD, FC1_OUT), jnp.float32).at[:FC2_OUT].set(fc2_w)
    w2p = w2p.astype(jnp.bfloat16)                                   # (128, 256)
    b2p = jnp.zeros((1, FC2_PAD), jnp.float32).at[0, :FC2_OUT].set(fc2_b)
    return w1, b1, w2p, b2p


# ======================= plain-JAX encoder glue =======================

def _batch_norm(x, gamma, beta, eps=1e-5):
    mean = jnp.mean(x, axis=(0, 2, 3), keepdims=True)
    var = jnp.var(x, axis=(0, 2, 3), keepdims=True)
    xhat = (x - mean) * lax.rsqrt(var + eps)
    return xhat * gamma[None, :, None, None] + beta[None, :, None, None]


def _conv_block(x, w, b, gamma, beta):
    y = lax.conv_general_dilated(x, w, window_strides=(1, 1), padding='SAME',
                                 dimension_numbers=('NCHW', 'OIHW', 'NCHW'))
    y = y + b[None, :, None, None]
    y = _batch_norm(y, gamma, beta)
    y = jnp.maximum(y, 0.0)
    y = lax.reduce_window(y, -jnp.inf, lax.max, (1, 1, 2, 2), (1, 1, 2, 2), 'VALID')
    return y


def encoder_embed(params, x):
    for i in range(1, 5):
        x = _conv_block(x, params[f'conv{i}.weight'], params[f'conv{i}.bias'],
                        params[f'bn{i}.weight'], params[f'bn{i}.bias'])
    return x.reshape(x.shape[0], -1)          # (N, 64)


def encoder_forward(params, x):
    emb = encoder_embed(params, x)
    return emb @ params['FC.weight'].T + params['FC.bias']


def _ce_loss(params, x, labels):
    logits = encoder_forward(params, x)
    logp = jax.nn.log_softmax(logits, axis=-1)
    return -jnp.mean(logp[jnp.arange(labels.shape[0]), labels])


def inner_train_step(params, support, labels):
    """Mirrors inner_train_step/update_params: first-order grads over ALL
       encoder params, accumulate FC grads."""
    acc_gw = jnp.zeros_like(params['FC.weight'])
    acc_gb = jnp.zeros_like(params['FC.bias'])
    for _ in range(INNER_ITERS):
        grads = jax.grad(_ce_loss)(params, support, labels)
        acc_gw = acc_gw + grads['FC.weight']
        acc_gb = acc_gb + grads['FC.bias']
        params = jax.tree_util.tree_map(lambda p, g: p - GD_LR * g, params, grads)
    return params, (acc_gw, acc_gb)


# ======================= MAMLP_FC forward =======================

def mamlp_fc_forward(enc_params, gen_w1, gen_b1, gen_w2p, gen_b2p,
                     data_shot, data_query):
    # support embeddings
    support = encoder_embed(enc_params, data_shot)                 # (shot*way, 64)
    sup3 = support.reshape(SHOT, -1, support.shape[-1])            # (shot, way, 64)

    # classifier generation (Pallas kernel), output padded to 128 lanes
    cls_init_pad = classifier_init_pallas(sup3, gen_w1, gen_b1,
                                          gen_w2p, gen_b2p)        # (way, 128)
    fc_weight_init = cls_init_pad[:, :H_DIM]                       # (way, 64)
    fc_bias_init = cls_init_pad[:, H_DIM]                          # (way,) == col 64

    # load generated classifier into the encoder
    params = dict(enc_params)
    params['FC.weight'] = fc_weight_init
    params['FC.bias'] = fc_bias_init

    # inner MAML loop on the support set
    labels = jnp.tile(jnp.arange(WAY, dtype=jnp.int32), SHOT)
    updated, (acc_gw, acc_gb) = inner_train_step(params, data_shot, labels)
    updated = dict(updated)
    updated['FC.weight'] = fc_weight_init - GD_LR * acc_gw
    updated['FC.bias'] = fc_bias_init - GD_LR * acc_gb

    # query classification + temperature: left to XLA to fuse with encoder tail
    # (a (12,64)@(64,4) matmul is far smaller than pallas_call launch overhead).
    q_emb = encoder_embed(updated, data_query)                     # (Nq, 64)
    logits = (q_emb @ updated['FC.weight'].T + updated['FC.bias']) * (1.0 / TEMPERATURE)
    return logits


# ======================= deterministic init =======================

def init_encoder_params(key):
    params = {}
    in_ch = 3
    keys = jax.random.split(key, 8)
    for i in range(1, 5):
        fan_in = in_ch * 9
        params[f'conv{i}.weight'] = (jax.random.normal(keys[i - 1], (64, in_ch, 3, 3),
                                                       jnp.float32)
                                     * (1.0 / fan_in ** 0.5))
        params[f'conv{i}.bias'] = jnp.zeros((64,), jnp.float32)
        params[f'bn{i}.weight'] = jnp.ones((64,), jnp.float32)
        params[f'bn{i}.bias'] = jnp.zeros((64,), jnp.float32)
        in_ch = 64
    # FC is overwritten by the generated classifier before it is ever used
    params['FC.weight'] = jnp.zeros((WAY, H_DIM), jnp.float32)
    params['FC.bias'] = jnp.zeros((WAY,), jnp.float32)
    return params


def init_fc_params(key):
    k1, k2, k3, k4 = jax.random.split(key, 4)
    fc1_w = jax.random.normal(k1, (FC1_OUT, 2 * H_DIM), jnp.float32) * (1.0 / (2 * H_DIM) ** 0.5)
    fc1_b = jax.random.normal(k2, (FC1_OUT,), jnp.float32) * 0.01
    fc2_w = jax.random.normal(k3, (FC2_OUT, FC1_OUT), jnp.float32) * (1.0 / FC1_OUT ** 0.5)
    fc2_b = jax.random.normal(k4, (FC2_OUT,), jnp.float32) * 0.01
    return fc1_w, fc1_b, fc2_w, fc2_b


if __name__ == "__main__":
    key = jax.random.PRNGKey(0)
    k_enc, k_fc, k_shot, k_query = jax.random.split(key, 4)

    enc_params = init_encoder_params(k_enc)
    fc1_w, fc1_b, fc2_w, fc2_b = init_fc_params(k_fc)
    # one-time weight prep outside jit: bf16 cast + lane padding, no transposes
    gen_w1, gen_b1, gen_w2p, gen_b2p = prepare_generator_params(fc1_w, fc1_b,
                                                                fc2_w, fc2_b)

    # data ordering matches label = arange(way).repeat(shot): [0..way-1] * shot
    data_shot = jax.random.normal(k_shot, (SHOT * WAY, 3, IMG, IMG), jnp.float32)
    data_query = jax.random.normal(k_query, (WAY * QUERY, 3, IMG, IMG), jnp.float32)

    fwd = jax.jit(mamlp_fc_forward)
    logits = fwd(enc_params, gen_w1, gen_b1, gen_w2p, gen_b2p, data_shot, data_query)
    logits = jax.block_until_ready(logits)

    assert logits.shape == (WAY * QUERY, WAY), logits.shape
    assert bool(jnp.all(jnp.isfinite(logits)))
    print("KERNEL_OK")
</pallas_src>

<mosaic_0001>
module attributes {stable_mosaic.version = 11 : i64} {
  func.func @_classifier_init_kernel(%arg0: memref<2x4x64xf32, #tpu.memory_space<vmem>>, %arg1: memref<256x128xbf16, #tpu.memory_space<vmem>>, %arg2: memref<1x256xf32, #tpu.memory_space<vmem>>, %arg3: memref<128x256xbf16, #tpu.memory_space<vmem>>, %arg4: memref<1x128xf32, #tpu.memory_space<vmem>>, %arg5: memref<4x128xf32, #tpu.memory_space<vmem>>) attributes {dimension_semantics = [], scalar_prefetch = 0 : i64, scratch_operands = 0 : i64, tpu.core_type = #tpu.core_type<tc>} {
    %c0 = arith.constant 0 : index
    %c0_0 = arith.constant 0 : index
    %c0_1 = arith.constant 0 : index
    %0 = vector.load %arg0[%c0, %c0_0, %c0_1] : memref<2x4x64xf32, #tpu.memory_space<vmem>>, vector<2x4x64xf32>
    %cst = arith.constant dense<0.000000e+00> : vector<4x64xf32>
    %1 = vector.multi_reduction <add>, %0, %cst [0] : vector<2x4x64xf32> to vector<4x64xf32>
    %cst_2 = arith.constant 2.000000e+00 : f32
    %2 = vector.broadcast %cst_2 : f32 to vector<4x64xf32>
    %3 = arith.divf %1, %2 : vector<4x64xf32>
    %cst_3 = arith.constant dense<0.000000e+00> : vector<64xf32>
    %4 = vector.multi_reduction <add>, %3, %cst_3 [0] : vector<4x64xf32> to vector<64xf32>
    %5 = vector.shape_cast %4 : vector<64xf32> to vector<1x64xf32>
    %6 = vector.broadcast %5 : vector<1x64xf32> to vector<4x64xf32>
    %7 = arith.subf %6, %3 : vector<4x64xf32>
    %cst_4 = arith.constant 0.333333343 : f32
    %8 = vector.broadcast %cst_4 : f32 to vector<4x64xf32>
    %9 = arith.mulf %7, %8 : vector<4x64xf32>
    %10 = tpu.concatenate %3, %9 in 1 : vector<4x64xf32>, vector<4x64xf32> -> vector<4x128xf32>
    %11 = arith.truncf %10 : vector<4x128xf32> to vector<4x128xbf16>
    %c0_5 = arith.constant 0 : index
    %c0_6 = arith.constant 0 : index
    %12 = vector.load %arg1[%c0_5, %c0_6] : memref<256x128xbf16, #tpu.memory_space<vmem>>, vector<256x128xbf16>
    %cst_7 = arith.constant dense<0.000000e+00> : vector<4x256xf32>
    %13 = tpu.matmul %11, %12, %cst_7 {dimension_numbers = #tpu.dot_dimension_numbers<[1], [1], [0], [0], [0, 0, 1, 0], [], []>} : vector<4x128xbf16>, vector<256x128xbf16>, vector<4x256xf32> -> vector<4x256xf32>
    %c0_8 = arith.constant 0 : index
    %c0_9 = arith.constant 0 : index
    %14 = vector.load %arg2[%c0_8, %c0_9] : memref<1x256xf32, #tpu.memory_space<vmem>>, vector<1x256xf32>
    %15 = vector.broadcast %14 : vector<1x256xf32> to vector<4x256xf32>
    %16 = arith.addf %13, %15 : vector<4x256xf32>
    %cst_10 = arith.constant 0.000000e+00 : f32
    %17 = vector.broadcast %cst_10 : f32 to vector<4x256xf32>
    %18 = arith.maximumf %16, %17 : vector<4x256xf32>
    %19 = arith.truncf %18 : vector<4x256xf32> to vector<4x256xbf16>
    %c0_11 = arith.constant 0 : index
    %c0_12 = arith.constant 0 : index
    %20 = vector.load %arg3[%c0_11, %c0_12] : memref<128x256xbf16, #tpu.memory_space<vmem>>, vector<128x256xbf16>
    %cst_13 = arith.constant dense<0.000000e+00> : vector<4x128xf32>
    %21 = tpu.matmul %19, %20, %cst_13 {dimension_numbers = #tpu.dot_dimension_numbers<[1], [1], [0], [0], [0, 0, 1, 0], [], []>} : vector<4x256xbf16>, vector<128x256xbf16>, vector<4x128xf32> -> vector<4x128xf32>
    %c0_14 = arith.constant 0 : index
    %c0_15 = arith.constant 0 : index
    %22 = vector.load %arg4[%c0_14, %c0_15] : memref<1x128xf32, #tpu.memory_space<vmem>>, vector<1x128xf32>
    %23 = vector.broadcast %22 : vector<1x128xf32> to vector<4x128xf32>
    %24 = arith.addf %21, %23 : vector<4x128xf32>
    %c0_16 = arith.constant 0 : index
    %c0_17 = arith.constant 0 : index
    %25 = vector.load %arg5[%c0_16, %c0_17] : memref<4x128xf32, #tpu.memory_space<vmem>>, vector<4x128xf32>
    tpu.vector_store %arg5[%c0_16, %c0_17], %24 {strides = array<i32>} : memref<4x128xf32, #tpu.memory_space<vmem>>, vector<4x128xf32>,
    return
  }
}

</mosaic_0001>

<llo_original>
// kernel: reverse
$region0: #{reverse}
  #allocation2 [shape = 's32[1]{0}', space=sflag, size = 0x4, scoped, tag = 'scoped memory for reverse']
  %s0 = inlined_call_operand.hbm [shape: f32[64,64,3,3], index: 0, kind: input, shape index: {}]
  %s1 = inlined_call_operand.vmem [shape: bf16[64,64,3,3], index: 1, kind: output, shape index: {}]
  $region1: #{reverse} parent=0
    #allocation0 [shape = 'u8[294912]{0}', space=vmem, size = 0x48000, scoped, tag = 'operand span for operand 0']
    #allocation1 [shape = 's32[1]{0}', space=sflag, size = 0x4, scoped, tag = 'scoped memory for reverse']
    %2 = vsyncpa [#allocation1], 0
    %s4 = ssub.s32 9216, 9216
    %5 = vsyncadd [#allocation1], %s4
    %s6 = sshll.u32 [#allocation0], 4
    %s7 = int_to_ptr.vmem [resolvable:$true] %s6
    %12 = dma.hbm_to_vmem [thread:$0]  %s0, 9216, %s7, [#allocation1], 128, 128, 8
    %13 = dma.done [#allocation1], 9216
    %s14 = scalar_lea.vmem [#allocation0], 512
    %v15 = vld [vmem:[%s14] sm:$0xff]
    %v16 = vpack.c.bf16 0.0, %v15
    %17 = vst [vmem:[%s1] sm:$0xf] %v16
    %s18 = scalar_lea.vmem [#allocation0], 320
    %v19 = vld [vmem:[%s18] sm:$0xff]
    %s20 = scalar_lea.vmem %s1, 96
    %v21 = vpack.c.bf16 0.0, %v19
    %22 = vst [vmem:[%s20] sm:$0xf] %v21
    %s23 = scalar_lea.vmem [#allocation0], 128
    %v24 = vld [vmem:[%s23] sm:$0xff]
    %s25 = scalar_lea.vmem %s1, 192
    %v26 = vpack.c.bf16 0.0, %v24
    %27 = vst [vmem:[%s25] sm:$0xf] %v26
    %s28 = scalar_lea.vmem [#allocation0], 448
    %v29 = vld [vmem:[%s28] sm:$0xff]
    %s30 = scalar_lea.vmem %s1, 32
    %v31 = vpack.c.bf16 0.0, %v29
    %32 = vst [vmem:[%s30] sm:$0xf] %v31
    %s33 = scalar_lea.vmem [#allocation0], 256
    %v34 = vld [vmem:[%s33] sm:$0xff]
    %s35 = scalar_lea.vmem %s1, 128
    %v36 = vpack.c.bf16 0.0, %v34
    %37 = vst [vmem:[%s35] sm:$0xf] %v36
    %s38 = scalar_lea.vmem [#allocation0], 64
    %v39 = vld [vmem:[%s38] sm:$0xff]
    %s40 = scalar_lea.vmem %s1, 224
    %v41 = vpack.c.bf16 0.0, %v39
    %42 = vst [vmem:[%s40] sm:$0xf] %v41
    %s43 = scalar_lea.vmem [#allocation0], 384
    %v44 = vld [vmem:[%s43] sm:$0xff]
    %s45 = scalar_lea.vmem %s1, 64
    %v46 = vpack.c.bf16 0.0, %v44
    %47 = vst [vmem:[%s45] sm:$0xf] %v46
    %s48 = scalar_lea.vmem [#allocation0], 192
    %v49 = vld [vmem:[%s48] sm:$0xff]
    %s50 = scalar_lea.vmem %s1, 160
    %v51 = vpack.c.bf16 0.0, %v49
    %52 = vst [vmem:[%s50] sm:$0xf] %v51
    %v53 = vld [vmem:[#allocation0] sm:$0xff]
    %s54 = scalar_lea.vmem %s1, 256
    %v55 = vpack.c.bf16 0.0, %v53
    %56 = vst [vmem:[%s54] sm:$0xf] %v55
    %s57 = scalar_lea.vmem [#allocation0], 520
    %v58 = vld [vmem:[%s57] sm:$0xff]
    %s59 = scalar_lea.vmem %s1, 4
    %v60 = vpack.c.bf16 0.0, %v58
    %61 = vst [vmem:[%s59] sm:$0xf] %v60
    %s62 = scalar_lea.vmem [#allocation0], 328
    %v63 = vld [vmem:[%s62] sm:$0xff]
    %s64 = scalar_lea.vmem %s1, 100
    %v65 = vpack.c.bf16 0.0, %v63
    %66 = vst [vmem:[%s64] sm:$0xf] %v65
    %s67 = scalar_lea.vmem [#allocation0], 136
    %v68 = vld [vmem:[%s67] sm:$0xff]
    %s69 = scalar_lea.vmem %s1, 196
    %v70 = vpack.c.bf16 0.0, %v68
    %71 = vst [vmem:[%s69] sm:$0xf] %v70
    %s72 = scalar_lea.vmem [#allocation0], 456
    %v73 = vld [vmem:[%s72] sm:$0xff]
    %s74 = scalar_lea.vmem %s1, 36
    %v75 = vpack.c.bf16 0.0, %v73
    %76 = vst [vmem:[%s74] sm:$0xf] %v75
    %s77 = scalar_lea.vmem [#allocation0], 264
    %v78 = vld [vmem:[%s77] sm:$0xff]
    %s79 = scalar_lea.vmem %s1, 132
    %v80 = vpack.c.bf16 0.0, %v78
    %81 = vst [vmem:[%s79] sm:$0xf] %v80
    %s82 = scalar_lea.vmem [#allocation0], 72
    %v83 = vld [vmem:[%s82] sm:$0xff]
    %s84 = scalar_lea.vmem %s1, 228
    %v85 = vpack.c.bf16 0.0, %v83
    %86 = vst [vmem:[%s84] sm:$0xf] %v85
    %s87 = scalar_lea.vmem [#allocation0], 392
    %v88 = vld [vmem:[%s87] sm:$0xff]
    %s89 = scalar_lea.vmem %s1, 68
    %v90 = vpack.c.bf16 0.0, %v88
    %91 = vst [vmem:[%s89] sm:$0xf] %v90
    %s92 = scalar_lea.vmem [#allocation0], 200
    %v93 = vld [vmem:[%s92] sm:$0xff]
    %s94 = scalar_lea.vmem %s1, 164
    %v95 = vpack.c.bf16 0.0, %v93
    %96 = vst [vmem:[%s94] sm:$0xf] %v95
    %s97 = scalar_lea.vmem [#allocation0], 8
    %v98 = vld [vmem:[%s97] sm:$0xff]
    %s99 = scalar_lea.vmem %s1, 260
    %v100 = vpack.c.bf16 0.0, %v98
    %101 = vst [vmem:[%s99] sm:$0xf] %v100
    %s102 = scalar_lea.vmem [#allocation0], 528
    %v103 = vld [vmem:[%s102] sm:$0xff]
    %s104 = scalar_lea.vmem %s1, 8
    %v105 = vpack.c.bf16 0.0, %v103
    %106 = vst [vmem:[%s104] sm:$0xf] %v105
    %s107 = scalar_lea.vmem [#allocation0], 336
    %v108 = vld [vmem:[%s107] sm:$0xff]
    %s109 = scalar_lea.vmem %s1, 104
    %v110 = vpack.c.bf16 0.0, %v108
    %111 = vst [vmem:[%s109] sm:$0xf] %v110
    %s112 = scalar_lea.vmem [#allocation0], 144
    %v113 = vld [vmem:[%s112] sm:$0xff]
    %s114 = scalar_lea.vmem %s1, 200
    %v115 = vpack.c.bf16 0.0, %v113
    %116 = vst [vmem:[%s114] sm:$0xf] %v115
    %s117 = scalar_lea.vmem [#allocation0], 464
    %v118 = vld [vmem:[%s117] sm:$0xff]
    %s119 = scalar_lea.vmem %s1, 40
    %v120 = vpack.c.bf16 0.0, %v118
    %121 = vst [vmem:[%s119] sm:$0xf] %v120
    %s122 = scalar_lea.vmem [#allocation0], 272
    %v123 = vld [vmem:[%s122] sm:$0xff]
    %s124 = scalar_lea.vmem %s1, 136
    %v125 = vpack.c.bf16 0.0, %v123
    %126 = vst [vmem:[%s124] sm:$0xf] %v125
    %s127 = scalar_lea.vmem [#allocation0], 80
    %v128 = vld [vmem:[%s127] sm:$0xff]
    %s129 = scalar_lea.vmem %s1, 232
    %v130 = vpack.c.bf16 0.0, %v128
    %131 = vst [vmem:[%s129] sm:$0xf] %v130
    %s132 = scalar_lea.vmem [#allocation0], 400
    %v133 = vld [vmem:[%s132] sm:$0xff]
    %s134 = scalar_lea.vmem %s1, 72
    %v135 = vpack.c.bf16 0.0, %v133
    %136 = vst [vmem:[%s134] sm:$0xf] %v135
    %s137 = scalar_lea.vmem [#allocation0], 208
    %v138 = vld [vmem:[%s137] sm:$0xff]
    %s139 = scalar_lea.vmem %s1, 168
    %v140 = vpack.c.bf16 0.0, %v138
    %141 = vst [vmem:[%s139] sm:$0xf] %v140
    %s142 = scalar_lea.vmem [#allocation0], 16
    %v143 = vld [vmem:[%s142] sm:$0xff]
    %s144 = scalar_lea.vmem %s1, 264
    %v145 = vpack.c.bf16 0.0, %v143
    %146 = vst [vmem:[%s144] sm:$0xf] %v145
    %s147 = scalar_lea.vmem [#allocation0], 536
    %v148 = vld [vmem:[%s147] sm:$0xff]
    %s149 = scalar_lea.vmem %s1, 12
    %v150 = vpack.c.bf16 0.0, %v148
    %151 = vst [vmem:[%s149] sm:$0xf] %v150
    %s152 = scalar_lea.vmem [#allocation0], 344
    %v153 = vld [vmem:[%s152] sm:$0xff]
    %s154 = scalar_lea.vmem %s1, 108
    %v155 = vpack.c.bf16 0.0, %v153
    %156 = vst [vmem:[%s154] sm:$0xf] %v155
    %s157 = scalar_lea.vmem [#allocation0], 152
    %v158 = vld [vmem:[%s157] sm:$0xff]
    %s159 = scalar_lea.vmem %s1, 204
    %v160 = vpack.c.bf16 0.0, %v158
    %161 = vst [vmem:[%s159] sm:$0xf] %v160
    %s162 = scalar_lea.vmem [#allocation0], 472
    %v163 = vld [vmem:[%s162] sm:$0xff]
    %s164 = scalar_lea.vmem %s1, 44
    %v165 = vpack.c.bf16 0.0, %v163
    %166 = vst [vmem:[%s164] sm:$0xf] %v165
    %s167 = scalar_lea.vmem [#allocation0], 280
    %v168 = vld [vmem:[%s167] sm:$0xff]
    %s169 = scalar_lea.vmem %s1, 140
    %v170 = vpack.c.bf16 0.0, %v168
    %171 = vst [vmem:[%s169] sm:$0xf] %v170
    %s172 = scalar_lea.vmem [#allocation0], 88
    %v173 = vld [vmem:[%s172] sm:$0xff]
    %s174 = scalar_lea.vmem %s1, 236
    %v175 = vpack.c.bf16 0.0, %v173
    %176 = vst [vmem:[%s174] sm:$0xf] %v175
    %s177 = scalar_lea.vmem [#allocation0], 408
    %v178 = vld [vmem:[%s177] sm:$0xff]
    %s179 = scalar_lea.vmem %s1, 76
    %v180 = vpack.c.bf16 0.0, %v178
    %181 = vst [vmem:[%s179] sm:$0xf] %v180
    %s182 = scalar_lea.vmem [#allocation0], 216
    %v183 = vld [vmem:[%s182] sm:$0xff]
    %s184 = scalar_lea.vmem %s1, 172
    %v185 = vpack.c.bf16 0.0, %v183
    %186 = vst [vmem:[%s184] sm:$0xf] %v185
    %s187 = scalar_lea.vmem [#allocation0], 24
    %v188 = vld [vmem:[%s187] sm:$0xff]
    %s189 = scalar_lea.vmem %s1, 268
    %v190 = vpack.c.bf16 0.0, %v188
    %191 = vst [vmem:[%s189] sm:$0xf] %v190
    %s192 = scalar_lea.vmem [#allocation0], 544
    %v193 = vld [vmem:[%s192] sm:$0xff]
    %s194 = scalar_lea.vmem %s1, 16
    %v195 = vpack.c.bf16 0.0, %v193
    %196 = vst [vmem:[%s194] sm:$0xf] %v195
    %s197 = scalar_lea.vmem [#allocation0], 352
    %v198 = vld [vmem:[%s197] sm:$0xff]
    %s199 = scalar_lea.vmem %s1, 112
    %v200 = vpack.c.bf16 0.0, %v198
    %201 = vst [vmem:[%s199] sm:$0xf] %v200
    %s202 = scalar_lea.vmem [#allocation0], 160
    %v203 = vld [vmem:[%s202] sm:$0xff]
    %s204 = scalar_lea.vmem %s1, 208
    %v205 = vpack.c.bf16 0.0, %v203
    %206 = vst [vmem:[%s204] sm:$0xf] %v205
    %s207 = scalar_lea.vmem [#allocation0], 480
    %v208 = vld [vmem:[%s207] sm:$0xff]
    %s209 = scalar_lea.vmem %s1, 48
    %v210 = vpack.c.bf16 0.0, %v208
    %211 = vst [vmem:[%s209] sm:$0xf] %v210
    %s212 = scalar_lea.vmem [#allocation0], 288
    %v213 = vld [vmem:[%s212] sm:$0xff]
    %s214 = scalar_lea.vmem %s1, 144
    %v215 = vpack.c.bf16 0.0, %v213
    %216 = vst [vmem:[%s214] sm:$0xf] %v215
    %s217 = scalar_lea.vmem [#allocation0], 96
    %v218 = vld [vmem:[%s217] sm:$0xff]
    %s219 = scalar_lea.vmem %s1, 240
    %v220 = vpack.c.bf16 0.0, %v218
    %221 = vst [vmem:[%s219] sm:$0xf] %v220
    %s222 = scalar_lea.vmem [#allocation0], 416
    %v223 = vld [vmem:[%s222] sm:$0xff]
    %s224 = scalar_lea.vmem %s1, 80
    %v225 = vpack.c.bf16 0.0, %v223
    %226 = vst [vmem:[%s224] sm:$0xf] %v225
    %s227 = scalar_lea.vmem [#allocation0], 224
    %v228 = vld [vmem:[%s227] sm:$0xff]
    %s229 = scalar_lea.vmem %s1, 176
    %v230 = vpack.c.bf16 0.0, %v228
    %231 = vst [vmem:[%s229] sm:$0xf] %v230
    %s232 = scalar_lea.vmem [#allocation0], 32
    %v233 = vld [vmem:[%s232] sm:$0xff]
    %s234 = scalar_lea.vmem %s1, 272
    %v235 = vpack.c.bf16 0.0, %v233
    %236 = vst [vmem:[%s234] sm:$0xf] %v235
    %s237 = scalar_lea.vmem [#allocation0], 552
    %v238 = vld [vmem:[%s237] sm:$0xff]
    %s239 = scalar_lea.vmem %s1, 20
    %v240 = vpack.c.bf16 0.0, %v238
    %241 = vst [vmem:[%s239] sm:$0xf] %v240
    %s242 = scalar_lea.vmem [#allocation0], 360
    %v243 = vld [vmem:[%s242] sm:$0xff]
    %s244 = scalar_lea.vmem %s1, 116
    %v245 = vpack.c.bf16 0.0, %v243
    %246 = vst [vmem:[%s244] sm:$0xf] %v245
    %s247 = scalar_lea.vmem [#allocation0], 168
    %v248 = vld [vmem:[%s247] sm:$0xff]
    %s249 = scalar_lea.vmem %s1, 212
    %v250 = vpack.c.bf16 0.0, %v248
    %251 = vst [vmem:[%s249] sm:$0xf] %v250
    %s252 = scalar_lea.vmem [#allocation0], 488
    %v253 = vld [vmem:[%s252] sm:$0xff]
    %s254 = scalar_lea.vmem %s1, 52
    %v255 = vpack.c.bf16 0.0, %v253
    %256 = vst [vmem:[%s254] sm:$0xf] %v255
    %s257 = scalar_lea.vmem [#allocation0], 296
    %v258 = vld [vmem:[%s257] sm:$0xff]
    %s259 = scalar_lea.vmem %s1, 148
    %v260 = vpack.c.bf16 0.0, %v258
    %261 = vst [vmem:[%s259] sm:$0xf] %v260
    %s262 = scalar_lea.vmem [#allocation0], 104
    %v263 = vld [vmem:[%s262] sm:$0xff]
    %s264 = scalar_lea.vmem %s1, 244
    %v265 = vpack.c.bf16 0.0, %v263
    %266 = vst [vmem:[%s264] sm:$0xf] %v265
    %s267 = scalar_lea.vmem [#allocation0], 424
    %v268 = vld [vmem:[%s267] sm:$0xff]
    %s269 = scalar_lea.vmem %s1, 84
    %v270 = vpack.c.bf16 0.0, %v268
    %271 = vst [vmem:[%s269] sm:$0xf] %v270
    %s272 = scalar_lea.vmem [#allocation0], 232
    %v273 = vld [vmem:[%s272] sm:$0xff]
    %s274 = scalar_lea.vmem %s1, 180
    %v275 = vpack.c.bf16 0.0, %v273
    %276 = vst [vmem:[%s274] sm:$0xf] %v275
    %s277 = scalar_lea.vmem [#allocation0], 40
    %v278 = vld [vmem:[%s277] sm:$0xff]
    %s279 = scalar_lea.vmem %s1, 276
    %v280 = vpack.c.bf16 0.0, %v278
    %281 = vst [vmem:[%s279] sm:$0xf] %v280
    %s282 = scalar_lea.vmem [#allocation0], 560
    %v283 = vld [vmem:[%s282] sm:$0xff]
    %s284 = scalar_lea.vmem %s1, 24
    %v285 = vpack.c.bf16 0.0, %v283
    %286 = vst [vmem:[%s284] sm:$0xf] %v285
    %s287 = scalar_lea.vmem [#allocation0], 368
    %v288 = vld [vmem:[%s287] sm:$0xff]
    %s289 = scalar_lea.vmem %s1, 120
    %v290 = vpack.c.bf16 0.0, %v288
    %291 = vst [vmem:[%s289] sm:$0xf] %v290
    %s292 = scalar_lea.vmem [#allocation0], 176
    %v293 = vld [vmem:[%s292] sm:$0xff]
    %s294 = scalar_lea.vmem %s1, 216
    %v295 = vpack.c.bf16 0.0, %v293
    %296 = vst [vmem:[%s294] sm:$0xf] %v295
    %s297 = scalar_lea.vmem [#allocation0], 496
    %v298 = vld [vmem:[%s297] sm:$0xff]
    %s299 = scalar_lea.vmem %s1, 56
    %v300 = vpack.c.bf16 0.0, %v298
    %301 = vst [vmem:[%s299] sm:$0xf] %v300
    %s302 = scalar_lea.vmem [#allocation0], 304
    %v303 = vld [vmem:[%s302] sm:$0xff]
    %s304 = scalar_lea.vmem %s1, 152
    %v305 = vpack.c.bf16 0.0, %v303
    %306 = vst [vmem:[%s304] sm:$0xf] %v305
    %s307 = scalar_lea.vmem [#allocation0], 112
    %v308 = vld [vmem:[%s307] sm:$0xff]
    %s309 = scalar_lea.vmem %s1, 248
    %v310 = vpack.c.bf16 0.0, %v308
    %311 = vst [vmem:[%s309] sm:$0xf] %v310
    %s312 = scalar_lea.vmem [#allocation0], 432
    %v313 = vld [vmem:[%s312] sm:$0xff]
    %s314 = scalar_lea.vmem %s1, 88
    %v315 = vpack.c.bf16 0.0, %v313
    %316 = vst [vmem:[%s314] sm:$0xf] %v315
    %s317 = scalar_lea.vmem [#allocation0], 240
    %v318 = vld [vmem:[%s317] sm:$0xff]
    %s319 = scalar_lea.vmem %s1, 184
    %v320 = vpack.c.bf16 0.0, %v318
    %321 = vst [vmem:[%s319] sm:$0xf] %v320
    %s322 = scalar_lea.vmem [#allocation0], 48
    %v323 = vld [vmem:[%s322] sm:$0xff]
    %s324 = scalar_lea.vmem %s1, 280
    %v325 = vpack.c.bf16 0.0, %v323
    %326 = vst [vmem:[%s324] sm:$0xf] %v325
    %s327 = scalar_lea.vmem [#allocation0], 568
    %v328 = vld [vmem:[%s327] sm:$0xff]
    %s329 = scalar_lea.vmem %s1, 28
    %v330 = vpack.c.bf16 0.0, %v328
    %331 = vst [vmem:[%s329] sm:$0xf] %v330
    %s332 = scalar_lea.vmem [#allocation0], 376
    %v333 = vld [vmem:[%s332] sm:$0xff]
    %s334 = scalar_lea.vmem %s1, 124
    %v335 = vpack.c.bf16 0.0, %v333
    %336 = vst [vmem:[%s334] sm:$0xf] %v335
    %s337 = scalar_lea.vmem [#allocation0], 184
    %v338 = vld [vmem:[%s337] sm:$0xff]
    %s339 = scalar_lea.vmem %s1, 220
    %v340 = vpack.c.bf16 0.0, %v338
    %341 = vst [vmem:[%s339] sm:$0xf] %v340
    %s342 = scalar_lea.vmem [#allocation0], 504
    %v343 = vld [vmem:[%s342] sm:$0xff]
    %s344 = scalar_lea.vmem %s1, 60
    %v345 = vpack.c.bf16 0.0, %v343
    %346 = vst [vmem:[%s344] sm:$0xf] %v345
    %s347 = scalar_lea.vmem [#allocation0], 312
    %v348 = vld [vmem:[%s347] sm:$0xff]
    %s349 = scalar_lea.vmem %s1, 156
    %v350 = vpack.c.bf16 0.0, %v348
    %351 = vst [vmem:[%s349] sm:$0xf] %v350
    %s352 = scalar_lea.vmem [#allocation0], 120
    %v353 = vld [vmem:[%s352] sm:$0xff]
    %s354 = scalar_lea.vmem %s1, 252
    %v355 = vpack.c.bf16 0.0, %v353
    %356 = vst [vmem:[%s354] sm:$0xf] %v355
    %s357 = scalar_lea.vmem [#allocation0], 440
    %v358 = vld [vmem:[%s357] sm:$0xff]
    %s359 = scalar_lea.vmem %s1, 92
    %v360 = vpack.c.bf16 0.0, %v358
    %361 = vst [vmem:[%s359] sm:$0xf] %v360
    %s362 = scalar_lea.vmem [#allocation0], 248
    %v363 = vld [vmem:[%s362] sm:$0xff]
    %s364 = scalar_lea.vmem %s1, 188
    %v365 = vpack.c.bf16 0.0, %v363
    %366 = vst [vmem:[%s364] sm:$0xf] %v365
    %s367 = scalar_lea.vmem [#allocation0], 56
    %v368 = vld [vmem:[%s367] sm:$0xff]
    %s369 = scalar_lea.vmem %s1, 284
    %v370 = vpack.c.bf16 0.0, %v368
    %371 = vst [vmem:[%s369] sm:$0xf] %v370
    %372 = vsyncpa [#allocation1], 1

// kernel: mamlp_fc_forward.1
$region0: #{mamlp_fc_forward.1}
  #allocation0 [shape = 'u32[]', space=smem, size = 0x4, offset = 0x4, fixed_abs, tag = 'smem constant byte address 0x4 - core index']
  #allocation1 [shape = 'u32[144,128]{1,0:T(1,128)}', space=vmem, size = 0x12000, scoped, tag = 'internal scratch']
  %s0 = inlined_call_operand.vmem [shape: f32[2,4,64], index: 0, kind: input, shape index: {}]
  %s1 = inlined_call_operand.vmem [shape: bf16[256,128], index: 1, kind: input, shape index: {}]
  %s2 = inlined_call_operand.vmem [shape: f32[1,256], index: 2, kind: input, shape index: {}]
  %s3 = inlined_call_operand.vmem [shape: bf16[128,256], index: 3, kind: input, shape index: {}]
  %s4 = inlined_call_operand.vmem [shape: f32[1,128], index: 4, kind: input, shape index: {}]
  %s5 = inlined_call_operand.vmem [shape: f32[4,128], index: 5, kind: output, shape index: {}]
  %s6 = sld [smem:[#allocation0]]
  $region30: #{mamlp_fc_forward.1} parent=0
    _
  %s8 = ssub.s32 1, %s6
  %s9 = scalar_select 0, %s8, %s6
  // Predicated region
  $region2: #{mamlp_fc_forward.1} parent=0 // pred_check
    _
  $region3: #{mamlp_fc_forward.1} parent=0 // pred_check_branch
    %11 = sbr.rel (0) target = $region5
  $region4: #{mamlp_fc_forward.1} parent=0 // pred_region
    _
  $region5: #{mamlp_fc_forward.1} parent=0 // pred_fallthru
    _
  // Predicated region
  $region6: #{mamlp_fc_forward.1} parent=0 // pred_check
    _
  $region7: #{mamlp_fc_forward.1} parent=0 // pred_check_branch
    %13 = sbr.rel (0) target = $region9
  $region8: #{mamlp_fc_forward.1} parent=0 // pred_region
    _
  $region9: #{mamlp_fc_forward.1} parent=0 // pred_fallthru
    _
  // Predicated region
  $region10: #{mamlp_fc_forward.1} parent=0 // pred_check
    _
  $region11: #{mamlp_fc_forward.1} parent=0 // pred_check_branch
    %15 = sbr.rel (0) target = $region13
  $region12: #{mamlp_fc_forward.1} parent=0 // pred_region
    _
  $region13: #{mamlp_fc_forward.1} parent=0 // pred_fallthru
    _
  // Predicated region
  $region14: #{mamlp_fc_forward.1} parent=0 // pred_check
    _
  $region15: #{mamlp_fc_forward.1} parent=0 // pred_check_branch
    %17 = sbr.rel (0) target = $region17
  $region16: #{mamlp_fc_forward.1} parent=0 // pred_region
    _
  $region17: #{mamlp_fc_forward.1} parent=0 // pred_fallthru
    _
  // Predicated region
  $region18: #{mamlp_fc_forward.1} parent=0 // pred_check
    _
  $region19: #{mamlp_fc_forward.1} parent=0 // pred_check_branch
    %19 = sbr.rel (0) target = $region21
  $region20: #{mamlp_fc_forward.1} parent=0 // pred_region
    _
  $region21: #{mamlp_fc_forward.1} parent=0 // pred_fallthru
    _
  %v21 = vld [vmem:[%s0] sm:$0xf]
  %v22 = vld [vmem:[%s0 + $0x4] sm:$0xf]
  %vm23 = vcmask 519168
  %v24 = vsel %vm23, %v21, 0.0
  %v25 = vsel %vm23, %v22, 0.0
  %v26 = vadd.f32 %v24, %v25
  %v27 = vrcp.pop 2.0
  %v28 = vmul.f32 %v26, %v27
  %v29 = vsel %vm23, %v28, 0.0
  %v30 = vrot.slane %v29, 4
  %v31 = vadd.f32 %v29, %v30
  %v32 = vrot.slane %v31, 2
  %v33 = vadd.f32 %v31, %v32
  %v34 = vrot.slane %v33, 1
  %v35 = vadd.f32 %v33, %v34
  %v36 = vsub.f32 %v35, %v28
  %v37 = vmul.f32 %v36, 0.33333334
  %39 = vrot.lane.b32.xlu0 %v37, 64
  %v40 = vpop.permute.xlu0 %39
  %vm42 = vcmask 523264
  %v43 = vsel %vm42, %v28, %v40
  %v44 = vpack.c.bf16 %v43, %v43
  %v45 = vld [vmem:[%s1] sm:$0xf]
  %v46 = vld [vmem:[%s1 + $0x4] sm:$0xf]
  %v47 = vld [vmem:[%s1 + $0x8] sm:$0xf]
  %v48 = vld [vmem:[%s1 + $0xc] sm:$0xf]
  %v49 = vld [vmem:[%s1 + $0x10] sm:$0xf]
  %v50 = vld [vmem:[%s1 + $0x14] sm:$0xf]
  %v51 = vld [vmem:[%s1 + $0x18] sm:$0xf]
  %v52 = vld [vmem:[%s1 + $0x1c] sm:$0xf]
  %v53 = vld [vmem:[%s1 + $0x20] sm:$0xf]
  %v54 = vld [vmem:[%s1 + $0x24] sm:$0xf]
  %v55 = vld [vmem:[%s1 + $0x28] sm:$0xf]
  %v56 = vld [vmem:[%s1 + $0x2c] sm:$0xf]
  %v57 = vld [vmem:[%s1 + $0x30] sm:$0xf]
  %v58 = vld [vmem:[%s1 + $0x34] sm:$0xf]
  %v59 = vld [vmem:[%s1 + $0x38] sm:$0xf]
  %v60 = vld [vmem:[%s1 + $0x3c] sm:$0xf]
  %v61 = vld [vmem:[%s1 + $0x40] sm:$0xf]
  %v62 = vld [vmem:[%s1 + $0x44] sm:$0xf]
  %v63 = vld [vmem:[%s1 + $0x48] sm:$0xf]
  %v64 = vld [vmem:[%s1 + $0x4c] sm:$0xf]
  %v65 = vld [vmem:[%s1 + $0x50] sm:$0xf]
  %v66 = vld [vmem:[%s1 + $0x54] sm:$0xf]
  %v67 = vld [vmem:[%s1 + $0x58] sm:$0xf]
  %v68 = vld [vmem:[%s1 + $0x5c] sm:$0xf]
  %v69 = vld [vmem:[%s1 + $0x60] sm:$0xf]
  %v70 = vld [vmem:[%s1 + $0x64] sm:$0xf]
  %v71 = vld [vmem:[%s1 + $0x68] sm:$0xf]
  %v72 = vld [vmem:[%s1 + $0x6c] sm:$0xf]
  %v73 = vld [vmem:[%s1 + $0x70] sm:$0xf]
  %v74 = vld [vmem:[%s1 + $0x74] sm:$0xf]
  %v75 = vld [vmem:[%s1 + $0x78] sm:$0xf]
  %v76 = vld [vmem:[%s1 + $0x7c] sm:$0xf]
  %v77 = vld [vmem:[%s2] sm:$0x3]
  %v79 = vlaneseq
  %v80 = vshrl.u32 %v79, 7
  %v81 = vsub.s32 0, %v80
  %v82 = vrot.slane %v77, %v81
  %v83 = vlaneseq
  %v84 = vshrl.u32 %v83, 7
  %v85 = vsub.s32 1, %v84
  %v86 = vrot.slane %v77, %v85
  %v121 = vunpack.c.l.b16 %v45
  %v122 = vunpack.c.l.b16 %v46
  %v123 = vunpack.c.l.b16 %v47
  %v124 = vunpack.c.l.b16 %v48
  %v125 = vunpack.c.l.b16 %v49
  %v126 = vunpack.c.l.b16 %v50
  %v127 = vunpack.c.l.b16 %v51
  %v128 = vunpack.c.l.b16 %v52
  %v129 = vunpack.c.l.b16 %v53
  %v130 = vunpack.c.l.b16 %v54
  %v131 = vunpack.c.l.b16 %v55
  %v132 = vunpack.c.l.b16 %v56
  %v133 = vunpack.c.l.b16 %v57
  %v134 = vunpack.c.l.b16 %v58
  %v135 = vunpack.c.l.b16 %v59
  %v136 = vunpack.c.l.b16 %v60
  %v137 = vunpack.c.l.b16 %v61
  %v138 = vunpack.c.l.b16 %v62
  %v139 = vunpack.c.l.b16 %v63
  %v140 = vunpack.c.l.b16 %v64
  %v141 = vunpack.c.l.b16 %v65
  %v142 = vunpack.c.l.b16 %v66
  %v143 = vunpack.c.l.b16 %v67
  %v144 = vunpack.c.l.b16 %v68
  %v145 = vunpack.c.l.b16 %v69
  %v146 = vunpack.c.l.b16 %v70
  %v147 = vunpack.c.l.b16 %v71
  %v148 = vunpack.c.l.b16 %v72
  %v149 = vunpack.c.l.b16 %v73
  %v150 = vunpack.c.l.b16 %v74
  %v151 = vunpack.c.l.b16 %v75
  %v152 = vunpack.c.l.b16 %v76
  %v153 = vpack.c.b16 %v122, %v121
  %v154 = vpack.c.b16 %v124, %v123
  %v155 = vpack.c.b16 %v126, %v125
  %v156 = vpack.c.b16 %v128, %v127
  %v157 = vpack.c.b16 %v130, %v129
  %v158 = vpack.c.b16 %v132, %v131
  %v159 = vpack.c.b16 %v134, %v133
  %v160 = vpack.c.b16 %v136, %v135
  %v161 = vpack.c.b16 %v138, %v137
  %v162 = vpack.c.b16 %v140, %v139
  %v163 = vpack.c.b16 %v142, %v141
  %v164 = vpack.c.b16 %v144, %v143
  %v165 = vpack.c.b16 %v146, %v145
  %v166 = vpack.c.b16 %v148, %v147
  %v167 = vpack.c.b16 %v150, %v149
  %v168 = vpack.c.b16 %v152, %v151
  %185 = vmatprep.subr.bf16.mxu0 0
  %186 = vmatpush1.bf16.xpose.msra.mxu0 %v153
  %187 = vmatprep.subr.bf16.mxu0 0
  %188 = vmatpush1.bf16.xpose.msra.mxu0 %v154
  %189 = vmatprep.subr.bf16.mxu0 0
  %190 = vmatpush1.bf16.xpose.msra.mxu0 %v155
  %191 = vmatprep.subr.bf16.mxu0 0
  %192 = vmatpush1.bf16.xpose.msra.mxu0 %v156
  %193 = vmatprep.subr.bf16.mxu0 0
  %194 = vmatpush1.bf16.xpose.msra.mxu0 %v157
  %195 = vmatprep.subr.bf16.mxu0 0
  %196 = vmatpush1.bf16.xpose.msra.mxu0 %v158
  %197 = vmatprep.subr.bf16.mxu0 0
  %198 = vmatpush1.bf16.xpose.msra.mxu0 %v159
  %199 = vmatprep.subr.bf16.mxu0 0
  %200 = vmatpush1.bf16.xpose.msra.mxu0 %v160
  %201 = vmatprep.subr.bf16.mxu0 0
  %202 = vmatpush1.bf16.xpose.msra.mxu0 %v161
  %203 = vmatprep.subr.bf16.mxu0 0
  %204 = vmatpush1.bf16.xpose.msra.mxu0 %v162
  %205 = vmatprep.subr.bf16.mxu0 0
  %206 = vmatpush1.bf16.xpose.msra.mxu0 %v163
  %207 = vmatprep.subr.bf16.mxu0 0
  %208 = vmatpush1.bf16.xpose.msra.mxu0 %v164
  %209 = vmatprep.subr.bf16.mxu0 0
  %210 = vmatpush1.bf16.xpose.msra.mxu0 %v165
  %211 = vmatprep.subr.bf16.mxu0 0
  %212 = vmatpush1.bf16.xpose.msra.mxu0 %v166
  %213 = vmatprep.subr.bf16.mxu0 0
  %214 = vmatpush1.bf16.xpose.msra.mxu0 %v167
  %215 = vmatprep.subr.bf16.mxu0 0
  %216 = vmatpush1.bf16.xpose.msra.mxu0 %v168
  %217 = vmatprep.mubr.bf16.mxu0 0
  %218 = vmatmul.mubr.bf16.gmra.mrb[0].mxu0 %v44
  %v219 = vpop.f32.mrb[0].mxu0
  %v220 = vadd.f32 %v82, %v219
  %v221 = vpop.f32.mrb[0].mxu0
  %v222 = vadd.f32 %v86, %v221
  %v223 = vpop.f32.mrb[0].mxu0
  %v224 = vpop.f32.mrb[0].mxu0
  %225 = vdwg.mxu0
  %v226 = vmax.f32 %v220, 0.0
  %v227 = vmax.f32 %v222, 0.0
  %v228 = vpack.c.bf16 %v226, %v226
  %v229 = vpack.c.bf16 %v227, %v227
  %v230 = vld [vmem:[%s3] sm:$0xff]
  %v231 = vld [vmem:[%s3 + $0x8] sm:$0xff]
  %v232 = vld [vmem:[%s3 + $0x10] sm:$0xff]
  %v233 = vld [vmem:[%s3 + $0x18] sm:$0xff]
  %v234 = vld [vmem:[%s3 + $0x20] sm:$0xff]
  %v235 = vld [vmem:[%s3 + $0x28] sm:$0xff]
  %v236 = vld [vmem:[%s3 + $0x30] sm:$0xff]
  %v237 = vld [vmem:[%s3 + $0x38] sm:$0xff]
  %v238 = vld [vmem:[%s3 + $0x40] sm:$0xff]
  %v239 = vld [vmem:[%s3 + $0x48] sm:$0xff]
  %v240 = vld [vmem:[%s3 + $0x50] sm:$0xff]
  %v241 = vld [vmem:[%s3 + $0x58] sm:$0xff]
  %v242 = vld [vmem:[%s3 + $0x60] sm:$0xff]
  %v243 = vld [vmem:[%s3 + $0x68] sm:$0xff]
  %v244 = vld [vmem:[%s3 + $0x70] sm:$0xff]
  %v245 = vld [vmem:[%s3 + $0x78] sm:$0xff]
  %v246 = vld [vmem:[%s4] sm:$0x1]
  %v248 = vlaneseq
  %v249 = vshrl.u32 %v248, 7
  %v250 = vsub.s32 0, %v249
  %v251 = vrot.slane %v246, %v250
  %v269 = vunpack.c.l.b16 %v230
  %v270 = vunpack.c.h.b16 %v230
  %v271 = vunpack.c.l.b16 %v231
  %v272 = vunpack.c.h.b16 %v231
  %v273 = vunpack.c.l.b16 %v232
  %v274 = vunpack.c.h.b16 %v232
  %v275 = vunpack.c.l.b16 %v233
  %v276 = vunpack.c.h.b16 %v233
  %v277 = vunpack.c.l.b16 %v234
  %v278 = vunpack.c.h.b16 %v234
  %v279 = vunpack.c.l.b16 %v235
  %v280 = vunpack.c.h.b16 %v235
  %v281 = vunpack.c.l.b16 %v236
  %v282 = vunpack.c.h.b16 %v236
  %v283 = vunpack.c.l.b16 %v237
  %v284 = vunpack.c.h.b16 %v237
  %v285 = vunpack.c.l.b16 %v238
  %v286 = vunpack.c.h.b16 %v238
  %v287 = vunpack.c.l.b16 %v239
  %v288 = vunpack.c.h.b16 %v239
  %v289 = vunpack.c.l.b16 %v240
  %v290 = vunpack.c.h.b16 %v240
  %v291 = vunpack.c.l.b16 %v241
  %v292 = vunpack.c.h.b16 %v241
  %v293 = vunpack.c.l.b16 %v242
  %v294 = vunpack.c.h.b16 %v242
  %v295 = vunpack.c.l.b16 %v243
  %v296 = vunpack.c.h.b16 %v243
  %v297 = vunpack.c.l.b16 %v244
  %v298 = vunpack.c.h.b16 %v244
  %v299 = vunpack.c.l.b16 %v245
  %v300 = vunpack.c.h.b16 %v245
  %v301 = vpack.c.b16 %v271, %v269
  %v302 = vpack.c.b16 %v272, %v270
  %v303 = vpack.c.b16 %v275, %v273
  %v304 = vpack.c.b16 %v276, %v274
  %v305 = vpack.c.b16 %v279, %v277
  %v306 = vpack.c.b16 %v280, %v278
  %v307 = vpack.c.b16 %v283, %v281
  %v308 = vpack.c.b16 %v284, %v282
  %v309 = vpack.c.b16 %v287, %v285
  %v310 = vpack.c.b16 %v288, %v286
  %v311 = vpack.c.b16 %v291, %v289
  %v312 = vpack.c.b16 %v292, %v290
  %v313 = vpack.c.b16 %v295, %v293
  %v314 = vpack.c.b16 %v296, %v294
  %v315 = vpack.c.b16 %v299, %v297
  %v316 = vpack.c.b16 %v300, %v298
  %333 = vmatprep.subr.bf16.mxu0 %v302
  %334 = vmatpush1.bf16.xpose.msra.mxu0 %v301
  %335 = vmatprep.subr.bf16.mxu0 %v304
  %336 = vmatpush1.bf16.xpose.msra.mxu0 %v303
  %337 = vmatprep.subr.bf16.mxu0 %v306
  %338 = vmatpush1.bf16.xpose.msra.mxu0 %v305
  %339 = vmatprep.subr.bf16.mxu0 %v308
  %340 = vmatpush1.bf16.xpose.msra.mxu0 %v307
  %341 = vmatprep.subr.bf16.mxu0 %v310
  %342 = vmatpush1.bf16.xpose.msra.mxu0 %v309
  %343 = vmatprep.subr.bf16.mxu0 %v312
  %344 = vmatpush1.bf16.xpose.msra.mxu0 %v311
  %345 = vmatprep.subr.bf16.mxu0 %v314
  %346 = vmatpush1.bf16.xpose.msra.mxu0 %v313
  %347 = vmatprep.subr.bf16.mxu0 %v316
  %348 = vmatpush1.bf16.xpose.msra.mxu0 %v315
  %349 = vmatprep.subr.bf16.mxu0 0
  %350 = vmatpush1.bf16.xpose.msra.mxu0 0
  %351 = vmatprep.subr.bf16.mxu0 0
  %352 = vmatpush1.bf16.xpose.msra.mxu0 0
  %353 = vmatprep.subr.bf16.mxu0 0
  %354 = vmatpush1.bf16.xpose.msra.mxu0 0
  %355 = vmatprep.subr.bf16.mxu0 0
  %356 = vmatpush1.bf16.xpose.msra.mxu0 0
  %357 = vmatprep.subr.bf16.mxu0 0
  %358 = vmatpush1.bf16.xpose.msra.mxu0 0
  %359 = vmatprep.subr.bf16.mxu0 0
  %360 = vmatpush1.bf16.xpose.msra.mxu0 0
  %361 = vmatprep.subr.bf16.mxu0 0
  %362 = vmatpush1.bf16.xpose.msra.mxu0 0
  %363 = vmatprep.subr.bf16.mxu0 0
  %364 = vmatpush1.bf16.xpose.msra.mxu0 0
  %365 = vmatprep.mubr.bf16.mxu0 %v229
  %366 = vmatmul.mubr.bf16.gmra.mrb[0].mxu0 %v228
  %v367 = vpop.f32.mrb[0].mxu0
  %v368 = vadd.f32 %v251, %v367
  %v369 = vpop.f32.mrb[0].mxu0
  %v370 = vpop.f32.mrb[0].mxu0
  %v371 = vpop.f32.mrb[0].mxu0
  %372 = vdwg.mxu0
  %373 = vst [vmem:[%s5] sm:$0xf] %v368
  // Predicated region
  $region22: #{mamlp_fc_forward.1} parent=0 // pred_check
    _
  $region23: #{mamlp_fc_forward.1} parent=0 // pred_check_branch
    %375 = sbr.rel (0) target = $region25
  $region24: #{mamlp_fc_forward.1} parent=0 // pred_region
    _
  $region25: #{mamlp_fc_forward.1} parent=0 // pred_fallthru
    _
  // Predicated region
  $region26: #{mamlp_fc_forward.1} parent=0 // pred_check
    _
  $region27: #{mamlp_fc_forward.1} parent=0 // pred_check_branch
    %377 = sbr.rel (0) target = $region29
  $region28: #{mamlp_fc_forward.1} parent=0 // pred_region
    _
  $region29: #{mamlp_fc_forward.1} parent=0 // pred_fallthru
    _

// kernel: reverse.2
$region0: #{reverse.2}
  #allocation0 [shape = 's32[1]{0}', space=sflag, size = 0x4, scoped, tag = 'scoped memory for reverse.2']
  %s0 = inlined_call_operand.vmem [shape: f32[64,64,3,3], index: 0, kind: input, shape index: {}]
  %s1 = inlined_call_operand.vmem [shape: bf16[64,64,3,3], index: 1, kind: output, shape index: {}]
  %s2 = scalar_lea.vmem %s0, 512
  %v3 = vld [vmem:[%s2] sm:$0xff]
  %v4 = vpack.c.bf16 0.0, %v3
  %5 = vst [vmem:[%s1] sm:$0xf] %v4
  %s6 = scalar_lea.vmem %s0, 320
  %v7 = vld [vmem:[%s6] sm:$0xff]
  %s8 = scalar_lea.vmem %s1, 96
  %v9 = vpack.c.bf16 0.0, %v7
  %10 = vst [vmem:[%s8] sm:$0xf] %v9
  %s11 = scalar_lea.vmem %s0, 128
  %v12 = vld [vmem:[%s11] sm:$0xff]
  %s13 = scalar_lea.vmem %s1, 192
  %v14 = vpack.c.bf16 0.0, %v12
  %15 = vst [vmem:[%s13] sm:$0xf] %v14
  %s16 = scalar_lea.vmem %s0, 448
  %v17 = vld [vmem:[%s16] sm:$0xff]
  %s18 = scalar_lea.vmem %s1, 32
  %v19 = vpack.c.bf16 0.0, %v17
  %20 = vst [vmem:[%s18] sm:$0xf] %v19
  %s21 = scalar_lea.vmem %s0, 256
  %v22 = vld [vmem:[%s21] sm:$0xff]
  %s23 = scalar_lea.vmem %s1, 128
  %v24 = vpack.c.bf16 0.0, %v22
  %25 = vst [vmem:[%s23] sm:$0xf] %v24
  %s26 = scalar_lea.vmem %s0, 64
  %v27 = vld [vmem:[%s26] sm:$0xff]
  %s28 = scalar_lea.vmem %s1, 224
  %v29 = vpack.c.bf16 0.0, %v27
  %30 = vst [vmem:[%s28] sm:$0xf] %v29
  %s31 = scalar_lea.vmem %s0, 384
  %v32 = vld [vmem:[%s31] sm:$0xff]
  %s33 = scalar_lea.vmem %s1, 64
  %v34 = vpack.c.bf16 0.0, %v32
  %35 = vst [vmem:[%s33] sm:$0xf] %v34
  %s36 = scalar_lea.vmem %s0, 192
  %v37 = vld [vmem:[%s36] sm:$0xff]
  %s38 = scalar_lea.vmem %s1, 160
  %v39 = vpack.c.bf16 0.0, %v37
  %40 = vst [vmem:[%s38] sm:$0xf] %v39
  %v41 = vld [vmem:[%s0] sm:$0xff]
  %s42 = scalar_lea.vmem %s1, 256
  %v43 = vpack.c.bf16 0.0, %v41
  %44 = vst [vmem:[%s42] sm:$0xf] %v43
  %s45 = scalar_lea.vmem %s0, 520
  %v46 = vld [vmem:[%s45] sm:$0xff]
  %s47 = scalar_lea.vmem %s1, 4
  %v48 = vpack.c.bf16 0.0, %v46
  %49 = vst [vmem:[%s47] sm:$0xf] %v48
  %s50 = scalar_lea.vmem %s0, 328
  %v51 = vld [vmem:[%s50] sm:$0xff]
  %s52 = scalar_lea.vmem %s1, 100
  %v53 = vpack.c.bf16 0.0, %v51
  %54 = vst [vmem:[%s52] sm:$0xf] %v53
  %s55 = scalar_lea.vmem %s0, 136
  %v56 = vld [vmem:[%s55] sm:$0xff]
  %s57 = scalar_lea.vmem %s1, 196
  %v58 = vpack.c.bf16 0.0, %v56
  %59 = vst [vmem:[%s57] sm:$0xf] %v58
  %s60 = scalar_lea.vmem %s0, 456
  %v61 = vld [vmem:[%s60] sm:$0xff]
  %s62 = scalar_lea.vmem %s1, 36
  %v63 = vpack.c.bf16 0.0, %v61
  %64 = vst [vmem:[%s62] sm:$0xf] %v63
  %s65 = scalar_lea.vmem %s0, 264
  %v66 = vld [vmem:[%s65] sm:$0xff]
  %s67 = scalar_lea.vmem %s1, 132
  %v68 = vpack.c.bf16 0.0, %v66
  %69 = vst [vmem:[%s67] sm:$0xf] %v68
  %s70 = scalar_lea.vmem %s0, 72
  %v71 = vld [vmem:[%s70] sm:$0xff]
  %s72 = scalar_lea.vmem %s1, 228
  %v73 = vpack.c.bf16 0.0, %v71
  %74 = vst [vmem:[%s72] sm:$0xf] %v73
  %s75 = scalar_lea.vmem %s0, 392
  %v76 = vld [vmem:[%s75] sm:$0xff]
  %s77 = scalar_lea.vmem %s1, 68
  %v78 = vpack.c.bf16 0.0, %v76
  %79 = vst [vmem:[%s77] sm:$0xf] %v78
  %s80 = scalar_lea.vmem %s0, 200
  %v81 = vld [vmem:[%s80] sm:$0xff]
  %s82 = scalar_lea.vmem %s1, 164
  %v83 = vpack.c.bf16 0.0, %v81
  %84 = vst [vmem:[%s82] sm:$0xf] %v83
  %s85 = scalar_lea.vmem %s0, 8
  %v86 = vld [vmem:[%s85] sm:$0xff]
  %s87 = scalar_lea.vmem %s1, 260
  %v88 = vpack.c.bf16 0.0, %v86
  %89 = vst [vmem:[%s87] sm:$0xf] %v88
  %s90 = scalar_lea.vmem %s0, 528
  %v91 = vld [vmem:[%s90] sm:$0xff]
  %s92 = scalar_lea.vmem %s1, 8
  %v93 = vpack.c.bf16 0.0, %v91
  %94 = vst [vmem:[%s92] sm:$0xf] %v93
  %s95 = scalar_lea.vmem %s0, 336
  %v96 = vld [vmem:[%s95] sm:$0xff]
  %s97 = scalar_lea.vmem %s1, 104
  %v98 = vpack.c.bf16 0.0, %v96
  %99 = vst [vmem:[%s97] sm:$0xf] %v98
  %s100 = scalar_lea.vmem %s0, 144
  %v101 = vld [vmem:[%s100] sm:$0xff]
  %s102 = scalar_lea.vmem %s1, 200
  %v103 = vpack.c.bf16 0.0, %v101
  %104 = vst [vmem:[%s102] sm:$0xf] %v103
  %s105 = scalar_lea.vmem %s0, 464
  %v106 = vld [vmem:[%s105] sm:$0xff]
  %s107 = scalar_lea.vmem %s1, 40
  %v108 = vpack.c.bf16 0.0, %v106
  %109 = vst [vmem:[%s107] sm:$0xf] %v108
  %s110 = scalar_lea.vmem %s0, 272
  %v111 = vld [vmem:[%s110] sm:$0xff]
  %s112 = scalar_lea.vmem %s1, 136
  %v113 = vpack.c.bf16 0.0, %v111
  %114 = vst [vmem:[%s112] sm:$0xf] %v113
  %s115 = scalar_lea.vmem %s0, 80
  %v116 = vld [vmem:[%s115] sm:$0xff]
  %s117 = scalar_lea.vmem %s1, 232
  %v118 = vpack.c.bf16 0.0, %v116
  %119 = vst [vmem:[%s117] sm:$0xf] %v118
  %s120 = scalar_lea.vmem %s0, 400
  %v121 = vld [vmem:[%s120] sm:$0xff]
  %s122 = scalar_lea.vmem %s1, 72
  %v123 = vpack.c.bf16 0.0, %v121
  %124 = vst [vmem:[%s122] sm:$0xf] %v123
  %s125 = scalar_lea.vmem %s0, 208
  %v126 = vld [vmem:[%s125] sm:$0xff]
  %s127 = scalar_lea.vmem %s1, 168
  %v128 = vpack.c.bf16 0.0, %v126
  %129 = vst [vmem:[%s127] sm:$0xf] %v128
  %s130 = scalar_lea.vmem %s0, 16
  %v131 = vld [vmem:[%s130] sm:$0xff]
  %s132 = scalar_lea.vmem %s1, 264
  %v133 = vpack.c.bf16 0.0, %v131
  %134 = vst [vmem:[%s132] sm:$0xf] %v133
  %s135 = scalar_lea.vmem %s0, 536
  %v136 = vld [vmem:[%s135] sm:$0xff]
  %s137 = scalar_lea.vmem %s1, 12
  %v138 = vpack.c.bf16 0.0, %v136
  %139 = vst [vmem:[%s137] sm:$0xf] %v138
  %s140 = scalar_lea.vmem %s0, 344
  %v141 = vld [vmem:[%s140] sm:$0xff]
  %s142 = scalar_lea.vmem %s1, 108
  %v143 = vpack.c.bf16 0.0, %v141
  %144 = vst [vmem:[%s142] sm:$0xf] %v143
  %s145 = scalar_lea.vmem %s0, 152
  %v146 = vld [vmem:[%s145] sm:$0xff]
  %s147 = scalar_lea.vmem %s1, 204
  %v148 = vpack.c.bf16 0.0, %v146
  %149 = vst [vmem:[%s147] sm:$0xf] %v148
  %s150 = scalar_lea.vmem %s0, 472
  %v151 = vld [vmem:[%s150] sm:$0xff]
  %s152 = scalar_lea.vmem %s1, 44
  %v153 = vpack.c.bf16 0.0, %v151
  %154 = vst [vmem:[%s152] sm:$0xf] %v153
  %s155 = scalar_lea.vmem %s0, 280
  %v156 = vld [vmem:[%s155] sm:$0xff]
  %s157 = scalar_lea.vmem %s1, 140
  %v158 = vpack.c.bf16 0.0, %v156
  %159 = vst [vmem:[%s157] sm:$0xf] %v158
  %s160 = scalar_lea.vmem %s0, 88
  %v161 = vld [vmem:[%s160] sm:$0xff]
  %s162 = scalar_lea.vmem %s1, 236
  %v163 = vpack.c.bf16 0.0, %v161
  %164 = vst [vmem:[%s162] sm:$0xf] %v163
  %s165 = scalar_lea.vmem %s0, 408
  %v166 = vld [vmem:[%s165] sm:$0xff]
  %s167 = scalar_lea.vmem %s1, 76
  %v168 = vpack.c.bf16 0.0, %v166
  %169 = vst [vmem:[%s167] sm:$0xf] %v168
  %s170 = scalar_lea.vmem %s0, 216
  %v171 = vld [vmem:[%s170] sm:$0xff]
  %s172 = scalar_lea.vmem %s1, 172
  %v173 = vpack.c.bf16 0.0, %v171
  %174 = vst [vmem:[%s172] sm:$0xf] %v173
  %s175 = scalar_lea.vmem %s0, 24
  %v176 = vld [vmem:[%s175] sm:$0xff]
  %s177 = scalar_lea.vmem %s1, 268
  %v178 = vpack.c.bf16 0.0, %v176
  %179 = vst [vmem:[%s177] sm:$0xf] %v178
  %s180 = scalar_lea.vmem %s0, 544
  %v181 = vld [vmem:[%s180] sm:$0xff]
  %s182 = scalar_lea.vmem %s1, 16
  %v183 = vpack.c.bf16 0.0, %v181
  %184 = vst [vmem:[%s182] sm:$0xf] %v183
  %s185 = scalar_lea.vmem %s0, 352
  %v186 = vld [vmem:[%s185] sm:$0xff]
  %s187 = scalar_lea.vmem %s1, 112
  %v188 = vpack.c.bf16 0.0, %v186
  %189 = vst [vmem:[%s187] sm:$0xf] %v188
  %s190 = scalar_lea.vmem %s0, 160
  %v191 = vld [vmem:[%s190] sm:$0xff]
  %s192 = scalar_lea.vmem %s1, 208
  %v193 = vpack.c.bf16 0.0, %v191
  %194 = vst [vmem:[%s192] sm:$0xf] %v193
  %s195 = scalar_lea.vmem %s0, 480
  %v196 = vld [vmem:[%s195] sm:$0xff]
  %s197 = scalar_lea.vmem %s1, 48
  %v198 = vpack.c.bf16 0.0, %v196
  %199 = vst [vmem:[%s197] sm:$0xf] %v198
  %s200 = scalar_lea.vmem %s0, 288
  %v201 = vld [vmem:[%s200] sm:$0xff]
  %s202 = scalar_lea.vmem %s1, 144
  %v203 = vpack.c.bf16 0.0, %v201
  %204 = vst [vmem:[%s202] sm:$0xf] %v203
  %s205 = scalar_lea.vmem %s0, 96
  %v206 = vld [vmem:[%s205] sm:$0xff]
  %s207 = scalar_lea.vmem %s1, 240
  %v208 = vpack.c.bf16 0.0, %v206
  %209 = vst [vmem:[%s207] sm:$0xf] %v208
  %s210 = scalar_lea.vmem %s0, 416
  %v211 = vld [vmem:[%s210] sm:$0xff]
  %s212 = scalar_lea.vmem %s1, 80
  %v213 = vpack.c.bf16 0.0, %v211
  %214 = vst [vmem:[%s212] sm:$0xf] %v213
  %s215 = scalar_lea.vmem %s0, 224
  %v216 = vld [vmem:[%s215] sm:$0xff]
  %s217 = scalar_lea.vmem %s1, 176
  %v218 = vpack.c.bf16 0.0, %v216
  %219 = vst [vmem:[%s217] sm:$0xf] %v218
  %s220 = scalar_lea.vmem %s0, 32
  %v221 = vld [vmem:[%s220] sm:$0xff]
  %s222 = scalar_lea.vmem %s1, 272
  %v223 = vpack.c.bf16 0.0, %v221
  %224 = vst [vmem:[%s222] sm:$0xf] %v223
  %s225 = scalar_lea.vmem %s0, 552
  %v226 = vld [vmem:[%s225] sm:$0xff]
  %s227 = scalar_lea.vmem %s1, 20
  %v228 = vpack.c.bf16 0.0, %v226
  %229 = vst [vmem:[%s227] sm:$0xf] %v228
  %s230 = scalar_lea.vmem %s0, 360
  %v231 = vld [vmem:[%s230] sm:$0xff]
  %s232 = scalar_lea.vmem %s1, 116
  %v233 = vpack.c.bf16 0.0, %v231
  %234 = vst [vmem:[%s232] sm:$0xf] %v233
  %s235 = scalar_lea.vmem %s0, 168
  %v236 = vld [vmem:[%s235] sm:$0xff]
  %s237 = scalar_lea.vmem %s1, 212
  %v238 = vpack.c.bf16 0.0, %v236
  %239 = vst [vmem:[%s237] sm:$0xf] %v238
  %s240 = scalar_lea.vmem %s0, 488
  %v241 = vld [vmem:[%s240] sm:$0xff]
  %s242 = scalar_lea.vmem %s1, 52
  %v243 = vpack.c.bf16 0.0, %v241
  %244 = vst [vmem:[%s242] sm:$0xf] %v243
  %s245 = scalar_lea.vmem %s0, 296
  %v246 = vld [vmem:[%s245] sm:$0xff]
  %s247 = scalar_lea.vmem %s1, 148
  %v248 = vpack.c.bf16 0.0, %v246
  %249 = vst [vmem:[%s247] sm:$0xf] %v248
  %s250 = scalar_lea.vmem %s0, 104
  %v251 = vld [vmem:[%s250] sm:$0xff]
  %s252 = scalar_lea.vmem %s1, 244
  %v253 = vpack.c.bf16 0.0, %v251
  %254 = vst [vmem:[%s252] sm:$0xf] %v253
  %s255 = scalar_lea.vmem %s0, 424
  %v256 = vld [vmem:[%s255] sm:$0xff]
  %s257 = scalar_lea.vmem %s1, 84
  %v258 = vpack.c.bf16 0.0, %v256
  %259 = vst [vmem:[%s257] sm:$0xf] %v258
  %s260 = scalar_lea.vmem %s0, 232
  %v261 = vld [vmem:[%s260] sm:$0xff]
  %s262 = scalar_lea.vmem %s1, 180
  %v263 = vpack.c.bf16 0.0, %v261
  %264 = vst [vmem:[%s262] sm:$0xf] %v263
  %s265 = scalar_lea.vmem %s0, 40
  %v266 = vld [vmem:[%s265] sm:$0xff]
  %s267 = scalar_lea.vmem %s1, 276
  %v268 = vpack.c.bf16 0.0, %v266
  %269 = vst [vmem:[%s267] sm:$0xf] %v268
  %s270 = scalar_lea.vmem %s0, 560
  %v271 = vld [vmem:[%s270] sm:$0xff]
  %s272 = scalar_lea.vmem %s1, 24
  %v273 = vpack.c.bf16 0.0, %v271
  %274 = vst [vmem:[%s272] sm:$0xf] %v273
  %s275 = scalar_lea.vmem %s0, 368
  %v276 = vld [vmem:[%s275] sm:$0xff]
  %s277 = scalar_lea.vmem %s1, 120
  %v278 = vpack.c.bf16 0.0, %v276
  %279 = vst [vmem:[%s277] sm:$0xf] %v278
  %s280 = scalar_lea.vmem %s0, 176
  %v281 = vld [vmem:[%s280] sm:$0xff]
  %s282 = scalar_lea.vmem %s1, 216
  %v283 = vpack.c.bf16 0.0, %v281
  %284 = vst [vmem:[%s282] sm:$0xf] %v283
  %s285 = scalar_lea.vmem %s0, 496
  %v286 = vld [vmem:[%s285] sm:$0xff]
  %s287 = scalar_lea.vmem %s1, 56
  %v288 = vpack.c.bf16 0.0, %v286
  %289 = vst [vmem:[%s287] sm:$0xf] %v288
  %s290 = scalar_lea.vmem %s0, 304
  %v291 = vld [vmem:[%s290] sm:$0xff]
  %s292 = scalar_lea.vmem %s1, 152
  %v293 = vpack.c.bf16 0.0, %v291
  %294 = vst [vmem:[%s292] sm:$0xf] %v293
  %s295 = scalar_lea.vmem %s0, 112
  %v296 = vld [vmem:[%s295] sm:$0xff]
  %s297 = scalar_lea.vmem %s1, 248
  %v298 = vpack.c.bf16 0.0, %v296
  %299 = vst [vmem:[%s297] sm:$0xf] %v298
  %s300 = scalar_lea.vmem %s0, 432
  %v301 = vld [vmem:[%s300] sm:$0xff]
  %s302 = scalar_lea.vmem %s1, 88
  %v303 = vpack.c.bf16 0.0, %v301
  %304 = vst [vmem:[%s302] sm:$0xf] %v303
  %s305 = scalar_lea.vmem %s0, 240
  %v306 = vld [vmem:[%s305] sm:$0xff]
  %s307 = scalar_lea.vmem %s1, 184
  %v308 = vpack.c.bf16 0.0, %v306
  %309 = vst [vmem:[%s307] sm:$0xf] %v308
  %s310 = scalar_lea.vmem %s0, 48
  %v311 = vld [vmem:[%s310] sm:$0xff]
  %s312 = scalar_lea.vmem %s1, 280
  %v313 = vpack.c.bf16 0.0, %v311
  %314 = vst [vmem:[%s312] sm:$0xf] %v313
  %s315 = scalar_lea.vmem %s0, 568
  %v316 = vld [vmem:[%s315] sm:$0xff]
  %s317 = scalar_lea.vmem %s1, 28
  %v318 = vpack.c.bf16 0.0, %v316
  %319 = vst [vmem:[%s317] sm:$0xf] %v318
  %s320 = scalar_lea.vmem %s0, 376
  %v321 = vld [vmem:[%s320] sm:$0xff]
  %s322 = scalar_lea.vmem %s1, 124
  %v323 = vpack.c.bf16 0.0, %v321
  %324 = vst [vmem:[%s322] sm:$0xf] %v323
  %s325 = scalar_lea.vmem %s0, 184
  %v326 = vld [vmem:[%s325] sm:$0xff]
  %s327 = scalar_lea.vmem %s1, 220
  %v328 = vpack.c.bf16 0.0, %v326
  %329 = vst [vmem:[%s327] sm:$0xf] %v328
  %s330 = scalar_lea.vmem %s0, 504
  %v331 = vld [vmem:[%s330] sm:$0xff]
  %s332 = scalar_lea.vmem %s1, 60
  %v333 = vpack.c.bf16 0.0, %v331
  %334 = vst [vmem:[%s332] sm:$0xf] %v333
  %s335 = scalar_lea.vmem %s0, 312
  %v336 = vld [vmem:[%s335] sm:$0xff]
  %s337 = scalar_lea.vmem %s1, 156
  %v338 = vpack.c.bf16 0.0, %v336
  %339 = vst [vmem:[%s337] sm:$0xf] %v338
  %s340 = scalar_lea.vmem %s0, 120
  %v341 = vld [vmem:[%s340] sm:$0xff]
  %s342 = scalar_lea.vmem %s1, 252
  %v343 = vpack.c.bf16 0.0, %v341
  %344 = vst [vmem:[%s342] sm:$0xf] %v343
  %s345 = scalar_lea.vmem %s0, 440
  %v346 = vld [vmem:[%s345] sm:$0xff]
  %s347 = scalar_lea.vmem %s1, 92
  %v348 = vpack.c.bf16 0.0, %v346
  %349 = vst [vmem:[%s347] sm:$0xf] %v348
  %s350 = scalar_lea.vmem %s0, 248
  %v351 = vld [vmem:[%s350] sm:$0xff]
  %s352 = scalar_lea.vmem %s1, 188
  %v353 = vpack.c.bf16 0.0, %v351
  %354 = vst [vmem:[%s352] sm:$0xf] %v353
  %s355 = scalar_lea.vmem %s0, 56
  %v356 = vld [vmem:[%s355] sm:$0xff]
  %s357 = scalar_lea.vmem %s1, 284
  %v358 = vpack.c.bf16 0.0, %v356
  %359 = vst [vmem:[%s357] sm:$0xf] %v358

// kernel: reverse.4
$region0: #{reverse.4}
  #allocation0 [shape = 's32[1]{0}', space=sflag, size = 0x4, scoped, tag = 'scoped memory for reverse.4']
  %s0 = inlined_call_operand.vmem [shape: bf16[64,64,3,3], index: 0, kind: input, shape index: {}]
  %s1 = inlined_call_operand.vmem [shape: bf16[64,64,3,3], index: 1, kind: output, shape index: {}]
  %s2 = scalar_lea.vmem %s0, 256
  %v3 = vld [vmem:[%s2] sm:$0xf]
  %v4 = vunpack.c.l.bf16 %v3
  %v5 = vunpack.c.h.bf16 %v3
  %v6 = vpack.c.bf16 0.0, %v4
  %7 = vst [vmem:[%s1] sm:$0xf] %v6
  %s8 = scalar_lea.vmem %s0, 160
  %v9 = vld [vmem:[%s8] sm:$0xf]
  %v10 = vunpack.c.l.bf16 %v9
  %v11 = vunpack.c.h.bf16 %v9
  %s12 = scalar_lea.vmem %s1, 96
  %v13 = vpack.c.bf16 0.0, %v10
  %14 = vst [vmem:[%s12] sm:$0xf] %v13
  %s15 = scalar_lea.vmem %s0, 64
  %v16 = vld [vmem:[%s15] sm:$0xf]
  %v17 = vunpack.c.l.bf16 %v16
  %v18 = vunpack.c.h.bf16 %v16
  %s19 = scalar_lea.vmem %s1, 192
  %v20 = vpack.c.bf16 0.0, %v17
  %21 = vst [vmem:[%s19] sm:$0xf] %v20
  %s22 = scalar_lea.vmem %s0, 224
  %v23 = vld [vmem:[%s22] sm:$0xf]
  %v24 = vunpack.c.l.bf16 %v23
  %v25 = vunpack.c.h.bf16 %v23
  %s26 = scalar_lea.vmem %s1, 32
  %v27 = vpack.c.bf16 0.0, %v24
  %28 = vst [vmem:[%s26] sm:$0xf] %v27
  %s29 = scalar_lea.vmem %s0, 128
  %v30 = vld [vmem:[%s29] sm:$0xf]
  %v31 = vunpack.c.l.bf16 %v30
  %v32 = vunpack.c.h.bf16 %v30
  %s33 = scalar_lea.vmem %s1, 128
  %v34 = vpack.c.bf16 0.0, %v31
  %35 = vst [vmem:[%s33] sm:$0xf] %v34
  %s36 = scalar_lea.vmem %s0, 32
  %v37 = vld [vmem:[%s36] sm:$0xf]
  %v38 = vunpack.c.l.bf16 %v37
  %v39 = vunpack.c.h.bf16 %v37
  %s40 = scalar_lea.vmem %s1, 224
  %v41 = vpack.c.bf16 0.0, %v38
  %42 = vst [vmem:[%s40] sm:$0xf] %v41
  %s43 = scalar_lea.vmem %s0, 192
  %v44 = vld [vmem:[%s43] sm:$0xf]
  %v45 = vunpack.c.l.bf16 %v44
  %v46 = vunpack.c.h.bf16 %v44
  %s47 = scalar_lea.vmem %s1, 64
  %v48 = vpack.c.bf16 0.0, %v45
  %49 = vst [vmem:[%s47] sm:$0xf] %v48
  %s50 = scalar_lea.vmem %s0, 96
  %v51 = vld [vmem:[%s50] sm:$0xf]
  %v52 = vunpack.c.l.bf16 %v51
  %v53 = vunpack.c.h.bf16 %v51
  %s54 = scalar_lea.vmem %s1, 160
  %v55 = vpack.c.bf16 0.0, %v52
  %56 = vst [vmem:[%s54] sm:$0xf] %v55
  %v57 = vld [vmem:[%s0] sm:$0xf]
  %v58 = vunpack.c.l.bf16 %v57
  %v59 = vunpack.c.h.bf16 %v57
  %s60 = scalar_lea.vmem %s1, 256
  %v61 = vpack.c.bf16 0.0, %v58
  %62 = vst [vmem:[%s60] sm:$0xf] %v61
  %s63 = scalar_lea.vmem %s0, 260
  %v64 = vld [vmem:[%s63] sm:$0xf]
  %v65 = vunpack.c.l.bf16 %v64
  %v66 = vunpack.c.h.bf16 %v64
  %s67 = scalar_lea.vmem %s1, 4
  %v68 = vpack.c.bf16 0.0, %v65
  %69 = vst [vmem:[%s67] sm:$0xf] %v68
  %s70 = scalar_lea.vmem %s0, 164
  %v71 = vld [vmem:[%s70] sm:$0xf]
  %v72 = vunpack.c.l.bf16 %v71
  %v73 = vunpack.c.h.bf16 %v71
  %s74 = scalar_lea.vmem %s1, 100
  %v75 = vpack.c.bf16 0.0, %v72
  %76 = vst [vmem:[%s74] sm:$0xf] %v75
  %s77 = scalar_lea.vmem %s0, 68
  %v78 = vld [vmem:[%s77] sm:$0xf]
  %v79 = vunpack.c.l.bf16 %v78
  %v80 = vunpack.c.h.bf16 %v78
  %s81 = scalar_lea.vmem %s1, 196
  %v82 = vpack.c.bf16 0.0, %v79
  %83 = vst [vmem:[%s81] sm:$0xf] %v82
  %s84 = scalar_lea.vmem %s0, 228
  %v85 = vld [vmem:[%s84] sm:$0xf]
  %v86 = vunpack.c.l.bf16 %v85
  %v87 = vunpack.c.h.bf16 %v85
  %s88 = scalar_lea.vmem %s1, 36
  %v89 = vpack.c.bf16 0.0, %v86
  %90 = vst [vmem:[%s88] sm:$0xf] %v89
  %s91 = scalar_lea.vmem %s0, 132
  %v92 = vld [vmem:[%s91] sm:$0xf]
  %v93 = vunpack.c.l.bf16 %v92
  %v94 = vunpack.c.h.bf16 %v92
  %s95 = scalar_lea.vmem %s1, 132
  %v96 = vpack.c.bf16 0.0, %v93
  %97 = vst [vmem:[%s95] sm:$0xf] %v96
  %s98 = scalar_lea.vmem %s0, 36
  %v99 = vld [vmem:[%s98] sm:$0xf]
  %v100 = vunpack.c.l.bf16 %v99
  %v101 = vunpack.c.h.bf16 %v99
  %s102 = scalar_lea.vmem %s1, 228
  %v103 = vpack.c.bf16 0.0, %v100
  %104 = vst [vmem:[%s102] sm:$0xf] %v103
  %s105 = scalar_lea.vmem %s0, 196
  %v106 = vld [vmem:[%s105] sm:$0xf]
  %v107 = vunpack.c.l.bf16 %v106
  %v108 = vunpack.c.h.bf16 %v106
  %s109 = scalar_lea.vmem %s1, 68
  %v110 = vpack.c.bf16 0.0, %v107
  %111 = vst [vmem:[%s109] sm:$0xf] %v110
  %s112 = scalar_lea.vmem %s0, 100
  %v113 = vld [vmem:[%s112] sm:$0xf]
  %v114 = vunpack.c.l.bf16 %v113
  %v115 = vunpack.c.h.bf16 %v113
  %s116 = scalar_lea.vmem %s1, 164
  %v117 = vpack.c.bf16 0.0, %v114
  %118 = vst [vmem:[%s116] sm:$0xf] %v117
  %s119 = scalar_lea.vmem %s0, 4
  %v120 = vld [vmem:[%s119] sm:$0xf]
  %v121 = vunpack.c.l.bf16 %v120
  %v122 = vunpack.c.h.bf16 %v120
  %s123 = scalar_lea.vmem %s1, 260
  %v124 = vpack.c.bf16 0.0, %v121
  %125 = vst [vmem:[%s123] sm:$0xf] %v124
  %s126 = scalar_lea.vmem %s0, 264
  %v127 = vld [vmem:[%s126] sm:$0xf]
  %v128 = vunpack.c.l.bf16 %v127
  %v129 = vunpack.c.h.bf16 %v127
  %s130 = scalar_lea.vmem %s1, 8
  %v131 = vpack.c.bf16 0.0, %v128
  %132 = vst [vmem:[%s130] sm:$0xf] %v131
  %s133 = scalar_lea.vmem %s0, 168
  %v134 = vld [vmem:[%s133] sm:$0xf]
  %v135 = vunpack.c.l.bf16 %v134
  %v136 = vunpack.c.h.bf16 %v134
  %s137 = scalar_lea.vmem %s1, 104
  %v138 = vpack.c.bf16 0.0, %v135
  %139 = vst [vmem:[%s137] sm:$0xf] %v138
  %s140 = scalar_lea.vmem %s0, 72
  %v141 = vld [vmem:[%s140] sm:$0xf]
  %v142 = vunpack.c.l.bf16 %v141
  %v143 = vunpack.c.h.bf16 %v141
  %s144 = scalar_lea.vmem %s1, 200
  %v145 = vpack.c.bf16 0.0, %v142
  %146 = vst [vmem:[%s144] sm:$0xf] %v145
  %s147 = scalar_lea.vmem %s0, 232
  %v148 = vld [vmem:[%s147] sm:$0xf]
  %v149 = vunpack.c.l.bf16 %v148
  %v150 = vunpack.c.h.bf16 %v148
  %s151 = scalar_lea.vmem %s1, 40
  %v152 = vpack.c.bf16 0.0, %v149
  %153 = vst [vmem:[%s151] sm:$0xf] %v152
  %s154 = scalar_lea.vmem %s0, 136
  %v155 = vld [vmem:[%s154] sm:$0xf]
  %v156 = vunpack.c.l.bf16 %v155
  %v157 = vunpack.c.h.bf16 %v155
  %s158 = scalar_lea.vmem %s1, 136
  %v159 = vpack.c.bf16 0.0, %v156
  %160 = vst [vmem:[%s158] sm:$0xf] %v159
  %s161 = scalar_lea.vmem %s0, 40
  %v162 = vld [vmem:[%s161] sm:$0xf]
  %v163 = vunpack.c.l.bf16 %v162
  %v164 = vunpack.c.h.bf16 %v162
  %s165 = scalar_lea.vmem %s1, 232
  %v166 = vpack.c.bf16 0.0, %v163
  %167 = vst [vmem:[%s165] sm:$0xf] %v166
  %s168 = scalar_lea.vmem %s0, 200
  %v169 = vld [vmem:[%s168] sm:$0xf]
  %v170 = vunpack.c.l.bf16 %v169
  %v171 = vunpack.c.h.bf16 %v169
  %s172 = scalar_lea.vmem %s1, 72
  %v173 = vpack.c.bf16 0.0, %v170
  %174 = vst [vmem:[%s172] sm:$0xf] %v173
  %s175 = scalar_lea.vmem %s0, 104
  %v176 = vld [vmem:[%s175] sm:$0xf]
  %v177 = vunpack.c.l.bf16 %v176
  %v178 = vunpack.c.h.bf16 %v176
  %s179 = scalar_lea.vmem %s1, 168
  %v180 = vpack.c.bf16 0.0, %v177
  %181 = vst [vmem:[%s179] sm:$0xf] %v180
  %s182 = scalar_lea.vmem %s0, 8
  %v183 = vld [vmem:[%s182] sm:$0xf]
  %v184 = vunpack.c.l.bf16 %v183
  %v185 = vunpack.c.h.bf16 %v183
  %s186 = scalar_lea.vmem %s1, 264
  %v187 = vpack.c.bf16 0.0, %v184
  %188 = vst [vmem:[%s186] sm:$0xf] %v187
  %s189 = scalar_lea.vmem %s0, 268
  %v190 = vld [vmem:[%s189] sm:$0xf]
  %v191 = vunpack.c.l.bf16 %v190
  %v192 = vunpack.c.h.bf16 %v190
  %s193 = scalar_lea.vmem %s1, 12
  %v194 = vpack.c.bf16 0.0, %v191
  %195 = vst [vmem:[%s193] sm:$0xf] %v194
  %s196 = scalar_lea.vmem %s0, 172
  %v197 = vld [vmem:[%s196] sm:$0xf]
  %v198 = vunpack.c.l.bf16 %v197
  %v199 = vunpack.c.h.bf16 %v197
  %s200 = scalar_lea.vmem %s1, 108
  %v201 = vpack.c.bf16 0.0, %v198
  %202 = vst [vmem:[%s200] sm:$0xf] %v201
  %s203 = scalar_lea.vmem %s0, 76
  %v204 = vld [vmem:[%s203] sm:$0xf]
  %v205 = vunpack.c.l.bf16 %v204
  %v206 = vunpack.c.h.bf16 %v204
  %s207 = scalar_lea.vmem %s1, 204
  %v208 = vpack.c.bf16 0.0, %v205
  %209 = vst [vmem:[%s207] sm:$0xf] %v208
  %s210 = scalar_lea.vmem %s0, 236
  %v211 = vld [vmem:[%s210] sm:$0xf]
  %v212 = vunpack.c.l.bf16 %v211
  %v213 = vunpack.c.h.bf16 %v211
  %s214 = scalar_lea.vmem %s1, 44
  %v215 = vpack.c.bf16 0.0, %v212
  %216 = vst [vmem:[%s214] sm:$0xf] %v215
  %s217 = scalar_lea.vmem %s0, 140
  %v218 = vld [vmem:[%s217] sm:$0xf]
  %v219 = vunpack.c.l.bf16 %v218
  %v220 = vunpack.c.h.bf16 %v218
  %s221 = scalar_lea.vmem %s1, 140
  %v222 = vpack.c.bf16 0.0, %v219
  %223 = vst [vmem:[%s221] sm:$0xf] %v222
  %s224 = scalar_lea.vmem %s0, 44
  %v225 = vld [vmem:[%s224] sm:$0xf]
  %v226 = vunpack.c.l.bf16 %v225
  %v227 = vunpack.c.h.bf16 %v225
  %s228 = scalar_lea.vmem %s1, 236
  %v229 = vpack.c.bf16 0.0, %v226
  %230 = vst [vmem:[%s228] sm:$0xf] %v229
  %s231 = scalar_lea.vmem %s0, 204
  %v232 = vld [vmem:[%s231] sm:$0xf]
  %v233 = vunpack.c.l.bf16 %v232
  %v234 = vunpack.c.h.bf16 %v232
  %s235 = scalar_lea.vmem %s1, 76
  %v236 = vpack.c.bf16 0.0, %v233
  %237 = vst [vmem:[%s235] sm:$0xf] %v236
  %s238 = scalar_lea.vmem %s0, 108
  %v239 = vld [vmem:[%s238] sm:$0xf]
  %v240 = vunpack.c.l.bf16 %v239
  %v241 = vunpack.c.h.bf16 %v239
  %s242 = scalar_lea.vmem %s1, 172
  %v243 = vpack.c.bf16 0.0, %v240
  %244 = vst [vmem:[%s242] sm:$0xf] %v243
  %s245 = scalar_lea.vmem %s0, 12
  %v246 = vld [vmem:[%s245] sm:$0xf]
  %v247 = vunpack.c.l.bf16 %v246
  %v248 = vunpack.c.h.bf16 %v246
  %s249 = scalar_lea.vmem %s1, 268
  %v250 = vpack.c.bf16 0.0, %v247
  %251 = vst [vmem:[%s249] sm:$0xf] %v250
  %s252 = scalar_lea.vmem %s0, 272
  %v253 = vld [vmem:[%s252] sm:$0xf]
  %v254 = vunpack.c.l.bf16 %v253
  %v255 = vunpack.c.h.bf16 %v253
  %s256 = scalar_lea.vmem %s1, 16
  %v257 = vpack.c.bf16 0.0, %v254
  %258 = vst [vmem:[%s256] sm:$0xf] %v257
  %s259 = scalar_lea.vmem %s0, 176
  %v260 = vld [vmem:[%s259] sm:$0xf]
  %v261 = vunpack.c.l.bf16 %v260
  %v262 = vunpack.c.h.bf16 %v260
  %s263 = scalar_lea.vmem %s1, 112
  %v264 = vpack.c.bf16 0.0, %v261
  %265 = vst [vmem:[%s263] sm:$0xf] %v264
  %s266 = scalar_lea.vmem %s0, 80
  %v267 = vld [vmem:[%s266] sm:$0xf]
  %v268 = vunpack.c.l.bf16 %v267
  %v269 = vunpack.c.h.bf16 %v267
  %s270 = scalar_lea.vmem %s1, 208
  %v271 = vpack.c.bf16 0.0, %v268
  %272 = vst [vmem:[%s270] sm:$0xf] %v271
  %s273 = scalar_lea.vmem %s0, 240
  %v274 = vld [vmem:[%s273] sm:$0xf]
  %v275 = vunpack.c.l.bf16 %v274
  %v276 = vunpack.c.h.bf16 %v274
  %s277 = scalar_lea.vmem %s1, 48
  %v278 = vpack.c.bf16 0.0, %v275
  %279 = vst [vmem:[%s277] sm:$0xf] %v278
  %s280 = scalar_lea.vmem %s0, 144
  %v281 = vld [vmem:[%s280] sm:$0xf]
  %v282 = vunpack.c.l.bf16 %v281
  %v283 = vunpack.c.h.bf16 %v281
  %s284 = scalar_lea.vmem %s1, 144
  %v285 = vpack.c.bf16 0.0, %v282
  %286 = vst [vmem:[%s284] sm:$0xf] %v285
  %s287 = scalar_lea.vmem %s0, 48
  %v288 = vld [vmem:[%s287] sm:$0xf]
  %v289 = vunpack.c.l.bf16 %v288
  %v290 = vunpack.c.h.bf16 %v288
  %s291 = scalar_lea.vmem %s1, 240
  %v292 = vpack.c.bf16 0.0, %v289
  %293 = vst [vmem:[%s291] sm:$0xf] %v292
  %s294 = scalar_lea.vmem %s0, 208
  %v295 = vld [vmem:[%s294] sm:$0xf]
  %v296 = vunpack.c.l.bf16 %v295
  %v297 = vunpack.c.h.bf16 %v295
  %s298 = scalar_lea.vmem %s1, 80
  %v299 = vpack.c.bf16 0.0, %v296
  %300 = vst [vmem:[%s298] sm:$0xf] %v299
  %s301 = scalar_lea.vmem %s0, 112
  %v302 = vld [vmem:[%s301] sm:$0xf]
  %v303 = vunpack.c.l.bf16 %v302
  %v304 = vunpack.c.h.bf16 %v302
  %s305 = scalar_lea.vmem %s1, 176
  %v306 = vpack.c.bf16 0.0, %v303
  %307 = vst [vmem:[%s305] sm:$0xf] %v306
  %s308 = scalar_lea.vmem %s0, 16
  %v309 = vld [vmem:[%s308] sm:$0xf]
  %v310 = vunpack.c.l.bf16 %v309
  %v311 = vunpack.c.h.bf16 %v309
  %s312 = scalar_lea.vmem %s1, 272
  %v313 = vpack.c.bf16 0.0, %v310
  %314 = vst [vmem:[%s312] sm:$0xf] %v313
  %s315 = scalar_lea.vmem %s0, 276
  %v316 = vld [vmem:[%s315] sm:$0xf]
  %v317 = vunpack.c.l.bf16 %v316
  %v318 = vunpack.c.h.bf16 %v316
  %s319 = scalar_lea.vmem %s1, 20
  %v320 = vpack.c.bf16 0.0, %v317
  %321 = vst [vmem:[%s319] sm:$0xf] %v320
  %s322 = scalar_lea.vmem %s0, 180
  %v323 = vld [vmem:[%s322] sm:$0xf]
  %v324 = vunpack.c.l.bf16 %v323
  %v325 = vunpack.c.h.bf16 %v323
  %s326 = scalar_lea.vmem %s1, 116
  %v327 = vpack.c.bf16 0.0, %v324
  %328 = vst [vmem:[%s326] sm:$0xf] %v327
  %s329 = scalar_lea.vmem %s0, 84
  %v330 = vld [vmem:[%s329] sm:$0xf]
  %v331 = vunpack.c.l.bf16 %v330
  %v332 = vunpack.c.h.bf16 %v330
  %s333 = scalar_lea.vmem %s1, 212
  %v334 = vpack.c.bf16 0.0, %v331
  %335 = vst [vmem:[%s333] sm:$0xf] %v334
  %s336 = scalar_lea.vmem %s0, 244
  %v337 = vld [vmem:[%s336] sm:$0xf]
  %v338 = vunpack.c.l.bf16 %v337
  %v339 = vunpack.c.h.bf16 %v337
  %s340 = scalar_lea.vmem %s1, 52
  %v341 = vpack.c.bf16 0.0, %v338
  %342 = vst [vmem:[%s340] sm:$0xf] %v341
  %s343 = scalar_lea.vmem %s0, 148
  %v344 = vld [vmem:[%s343] sm:$0xf]
  %v345 = vunpack.c.l.bf16 %v344
  %v346 = vunpack.c.h.bf16 %v344
  %s347 = scalar_lea.vmem %s1, 148
  %v348 = vpack.c.bf16 0.0, %v345
  %349 = vst [vmem:[%s347] sm:$0xf] %v348
  %s350 = scalar_lea.vmem %s0, 52
  %v351 = vld [vmem:[%s350] sm:$0xf]
  %v352 = vunpack.c.l.bf16 %v351
  %v353 = vunpack.c.h.bf16 %v351
  %s354 = scalar_lea.vmem %s1, 244
  %v355 = vpack.c.bf16 0.0, %v352
  %356 = vst [vmem:[%s354] sm:$0xf] %v355
  %s357 = scalar_lea.vmem %s0, 212
  %v358 = vld [vmem:[%s357] sm:$0xf]
  %v359 = vunpack.c.l.bf16 %v358
  %v360 = vunpack.c.h.bf16 %v358
  %s361 = scalar_lea.vmem %s1, 84
  %v362 = vpack.c.bf16 0.0, %v359
  %363 = vst [vmem:[%s361] sm:$0xf] %v362
  %s364 = scalar_lea.vmem %s0, 116
  %v365 = vld [vmem:[%s364] sm:$0xf]
  %v366 = vunpack.c.l.bf16 %v365
  %v367 = vunpack.c.h.bf16 %v365
  %s368 = scalar_lea.vmem %s1, 180
  %v369 = vpack.c.bf16 0.0, %v366
  %370 = vst [vmem:[%s368] sm:$0xf] %v369
  %s371 = scalar_lea.vmem %s0, 20
  %v372 = vld [vmem:[%s371] sm:$0xf]
  %v373 = vunpack.c.l.bf16 %v372
  %v374 = vunpack.c.h.bf16 %v372
  %s375 = scalar_lea.vmem %s1, 276
  %v376 = vpack.c.bf16 0.0, %v373
  %377 = vst [vmem:[%s375] sm:$0xf] %v376
  %s378 = scalar_lea.vmem %s0, 280
  %v379 = vld [vmem:[%s378] sm:$0xf]
  %v380 = vunpack.c.l.bf16 %v379
  %v381 = vunpack.c.h.bf16 %v379
  %s382 = scalar_lea.vmem %s1, 24
  %v383 = vpack.c.bf16 0.0, %v380
  %384 = vst [vmem:[%s382] sm:$0xf] %v383
  %s385 = scalar_lea.vmem %s0, 184
  %v386 = vld [vmem:[%s385] sm:$0xf]
  %v387 = vunpack.c.l.bf16 %v386
  %v388 = vunpack.c.h.bf16 %v386
  %s389 = scalar_lea.vmem %s1, 120
  %v390 = vpack.c.bf16 0.0, %v387
  %391 = vst [vmem:[%s389] sm:$0xf] %v390
  %s392 = scalar_lea.vmem %s0, 88
  %v393 = vld [vmem:[%s392] sm:$0xf]
  %v394 = vunpack.c.l.bf16 %v393
  %v395 = vunpack.c.h.bf16 %v393
  %s396 = scalar_lea.vmem %s1, 216
  %v397 = vpack.c.bf16 0.0, %v394
  %398 = vst [vmem:[%s396] sm:$0xf] %v397
  %s399 = scalar_lea.vmem %s0, 248
  %v400 = vld [vmem:[%s399] sm:$0xf]
  %v401 = vunpack.c.l.bf16 %v400
  %v402 = vunpack.c.h.bf16 %v400
  %s403 = scalar_lea.vmem %s1, 56
  %v404 = vpack.c.bf16 0.0, %v401
  %405 = vst [vmem:[%s403] sm:$0xf] %v404
  %s406 = scalar_lea.vmem %s0, 152
  %v407 = vld [vmem:[%s406] sm:$0xf]
  %v408 = vunpack.c.l.bf16 %v407
  %v409 = vunpack.c.h.bf16 %v407
  %s410 = scalar_lea.vmem %s1, 152
  %v411 = vpack.c.bf16 0.0, %v408
  %412 = vst [vmem:[%s410] sm:$0xf] %v411
  %s413 = scalar_lea.vmem %s0, 56
  %v414 = vld [vmem:[%s413] sm:$0xf]
  %v415 = vunpack.c.l.bf16 %v414
  %v416 = vunpack.c.h.bf16 %v414
  %s417 = scalar_lea.vmem %s1, 248
  %v418 = vpack.c.bf16 0.0, %v415
  %419 = vst [vmem:[%s417] sm:$0xf] %v418
  %s420 = scalar_lea.vmem %s0, 216
  %v421 = vld [vmem:[%s420] sm:$0xf]
  %v422 = vunpack.c.l.bf16 %v421
  %v423 = vunpack.c.h.bf16 %v421
  %s424 = scalar_lea.vmem %s1, 88
  %v425 = vpack.c.bf16 0.0, %v422
  %426 = vst [vmem:[%s424] sm:$0xf] %v425
  %s427 = scalar_lea.vmem %s0, 120
  %v428 = vld [vmem:[%s427] sm:$0xf]
  %v429 = vunpack.c.l.bf16 %v428
  %v430 = vunpack.c.h.bf16 %v428
  %s431 = scalar_lea.vmem %s1, 184
  %v432 = vpack.c.bf16 0.0, %v429
  %433 = vst [vmem:[%s431] sm:$0xf] %v432
  %s434 = scalar_lea.vmem %s0, 24
  %v435 = vld [vmem:[%s434] sm:$0xf]
  %v436 = vunpack.c.l.bf16 %v435
  %v437 = vunpack.c.h.bf16 %v435
  %s438 = scalar_lea.vmem %s1, 280
  %v439 = vpack.c.bf16 0.0, %v436
  %440 = vst [vmem:[%s438] sm:$0xf] %v439
  %s441 = scalar_lea.vmem %s0, 284
  %v442 = vld [vmem:[%s441] sm:$0xf]
  %v443 = vunpack.c.l.bf16 %v442
  %v444 = vunpack.c.h.bf16 %v442
  %s445 = scalar_lea.vmem %s1, 28
  %v446 = vpack.c.bf16 0.0, %v443
  %447 = vst [vmem:[%s445] sm:$0xf] %v446
  %s448 = scalar_lea.vmem %s0, 188
  %v449 = vld [vmem:[%s448] sm:$0xf]
  %v450 = vunpack.c.l.bf16 %v449
  %v451 = vunpack.c.h.bf16 %v449
  %s452 = scalar_lea.vmem %s1, 124
  %v453 = vpack.c.bf16 0.0, %v450
  %454 = vst [vmem:[%s452] sm:$0xf] %v453
  %s455 = scalar_lea.vmem %s0, 92
  %v456 = vld [vmem:[%s455] sm:$0xf]
  %v457 = vunpack.c.l.bf16 %v456
  %v458 = vunpack.c.h.bf16 %v456
  %s459 = scalar_lea.vmem %s1, 220
  %v460 = vpack.c.bf16 0.0, %v457
  %461 = vst [vmem:[%s459] sm:$0xf] %v460
  %s462 = scalar_lea.vmem %s0, 252
  %v463 = vld [vmem:[%s462] sm:$0xf]
  %v464 = vunpack.c.l.bf16 %v463
  %v465 = vunpack.c.h.bf16 %v463
  %s466 = scalar_lea.vmem %s1, 60
  %v467 = vpack.c.bf16 0.0, %v464
  %468 = vst [vmem:[%s466] sm:$0xf] %v467
  %s469 = scalar_lea.vmem %s0, 156
  %v470 = vld [vmem:[%s469] sm:$0xf]
  %v471 = vunpack.c.l.bf16 %v470
  %v472 = vunpack.c.h.bf16 %v470
  %s473 = scalar_lea.vmem %s1, 156
  %v474 = vpack.c.bf16 0.0, %v471
  %475 = vst [vmem:[%s473] sm:$0xf] %v474
  %s476 = scalar_lea.vmem %s0, 60
  %v477 = vld [vmem:[%s476] sm:$0xf]
  %v478 = vunpack.c.l.bf16 %v477
  %v479 = vunpack.c.h.bf16 %v477
  %s480 = scalar_lea.vmem %s1, 252
  %v481 = vpack.c.bf16 0.0, %v478
  %482 = vst [vmem:[%s480] sm:$0xf] %v481
  %s483 = scalar_lea.vmem %s0, 220
  %v484 = vld [vmem:[%s483] sm:$0xf]
  %v485 = vunpack.c.l.bf16 %v484
  %v486 = vunpack.c.h.bf16 %v484
  %s487 = scalar_lea.vmem %s1, 92
  %v488 = vpack.c.bf16 0.0, %v485
  %489 = vst [vmem:[%s487] sm:$0xf] %v488
  %s490 = scalar_lea.vmem %s0, 124
  %v491 = vld [vmem:[%s490] sm:$0xf]
  %v492 = vunpack.c.l.bf16 %v491
  %v493 = vunpack.c.h.bf16 %v491
  %s494 = scalar_lea.vmem %s1, 188
  %v495 = vpack.c.bf16 0.0, %v492
  %496 = vst [vmem:[%s494] sm:$0xf] %v495
  %s497 = scalar_lea.vmem %s0, 28
  %v498 = vld [vmem:[%s497] sm:$0xf]
  %v499 = vunpack.c.l.bf16 %v498
  %v500 = vunpack.c.h.bf16 %v498
  %s501 = scalar_lea.vmem %s1, 284
  %v502 = vpack.c.bf16 0.0, %v499
  %503 = vst [vmem:[%s501] sm:$0xf] %v502

</llo_original>
